<compile_context>
chip_gen: v6e
topology: v6e:2x2x1
jax: 0.10.0
libtpu: 0.0.40
codegen_flags: <defaults>
</compile_context>

<pallas_src>
import functools

import jax
import jax.numpy as jnp
from jax import lax
from jax.experimental import pallas as pl
from jax.experimental.pallas import tpu as pltpu

INPUT_SIZE = 32    # E (embed dim)
NUM_HEADS = 4
HIDDEN_SIZE = 64   # FFN hidden
SEQ_LEN = 8
BATCH = 2
LN_EPS = 1e-5

E = INPUT_SIZE
H = HIDDEN_SIZE

# Static lane offsets into the packed weight slab wa = [Wqkv.T | Wout.T | W1.T].
_WQKV_OFF = 0          # (E, 3E)
_WOUT_OFF = 3 * E      # (E, E)
_W1_OFF = 4 * E        # (E, H)
_WA_COLS = 4 * E + H   # 192

# Row indices into the packed bias/gamma/beta slab (8, 3E).
_BQKV_ROW, _BOUT_ROW, _B1_ROW, _B2_ROW = 0, 1, 2, 3
_G1_ROW, _BE1_ROW, _G2_ROW, _BE2_ROW = 4, 5, 6, 7
_BIAS_COLS = 3 * E     # 96


def _layer_norm(x, gamma, beta):
    mu = jnp.mean(x, axis=-1, keepdims=True)
    var = jnp.mean(jnp.square(x - mu), axis=-1, keepdims=True)
    return (x - mu) * lax.rsqrt(var + LN_EPS) * gamma + beta


def transformer_viseme_kernel(x_ref, wa_ref, w2_ref, bias_ref, o_ref,
                              *, batch, num_heads):
    x = x_ref[...].astype(jnp.float32)          # (S*B, E), seq-major tokens
    bs, e = x.shape
    dh = e // num_heads
    scale = 1.0 / float(dh) ** 0.5

    wa = wa_ref[...]                            # (E, 4E+H) packed weights
    bias = bias_ref[...]                        # (8, 3E)   packed vectors

    w_qkv = wa[:, _WQKV_OFF:_WQKV_OFF + 3 * e]  # (E, 3E)
    w_out = wa[:, _WOUT_OFF:_WOUT_OFF + e]      # (E, E)
    w_1 = wa[:, _W1_OFF:_W1_OFF + H]            # (E, H)

    b_qkv = bias[_BQKV_ROW:_BQKV_ROW + 1, :3 * e]
    b_out = bias[_BOUT_ROW:_BOUT_ROW + 1, :e]
    b_1 = bias[_B1_ROW:_B1_ROW + 1, :H]
    b_2 = bias[_B2_ROW:_B2_ROW + 1, :e]
    g1 = bias[_G1_ROW:_G1_ROW + 1, :e]
    be1 = bias[_BE1_ROW:_BE1_ROW + 1, :e]
    g2 = bias[_G2_ROW:_G2_ROW + 1, :e]
    be2 = bias[_BE2_ROW:_BE2_ROW + 1, :e]

    # --- packed QKV projection (contracted-major weights, no in-kernel .T) ---
    qkv = jnp.dot(x, w_qkv, preferred_element_type=jnp.float32) + b_qkv
    q = qkv[:, 0 * e:1 * e]
    k = qkv[:, 1 * e:2 * e]
    v = qkv[:, 2 * e:3 * e]

    # Block-diagonal batch mask for seq-major tokens: token t belongs to batch
    # t % batch.  Computed once, reused by every head.
    row_b = lax.broadcasted_iota(jnp.int32, (bs, bs), 0) % batch
    col_b = lax.broadcasted_iota(jnp.int32, (bs, bs), 1) % batch
    mask_bias = jnp.where(row_b == col_b, 0.0, -1e30).astype(jnp.float32)

    # --- heads: softmax(q_h k_h^T) v_h, then ONE fused output projection ---
    # TODO(synk): on v7x add grid=(B,) with dimension_semantics=("parallel",) to
    # use the second TensorCore and drop the mask; not worth it on v5e/v6e.
    heads = []
    for h in range(num_heads):                  # static unroll (4 heads)
        lo = h * dh
        qh = q[:, lo:lo + dh]                   # (BS, dh)
        kh = k[:, lo:lo + dh]
        vh = v[:, lo:lo + dh]
        # q_h @ k_h^T as a dot_general (no materialized transpose)
        s = lax.dot_general(qh, kh, (((1,), (1,)), ((), ())),
                            preferred_element_type=jnp.float32)     # (BS, BS)
        s = s * scale + mask_bias
        s = s - jnp.max(s, axis=-1, keepdims=True)
        p = jnp.exp(s)
        p = p * pl.reciprocal(jnp.sum(p, axis=-1, keepdims=True), approx=True)
        heads.append(jnp.dot(p, vh, preferred_element_type=jnp.float32))
    o_cat = jnp.concatenate(heads, axis=-1)     # (BS, E): 4 lane-offset inserts
    attn = jnp.dot(o_cat, w_out, preferred_element_type=jnp.float32) + b_out

    # --- residual + norm1 (dropout = identity at inference) ---
    n1 = _layer_norm(x + attn, g1, be1)

    # --- feed-forward: linear1 -> relu -> linear2 ---
    h1 = jnp.dot(n1, w_1, preferred_element_type=jnp.float32) + b_1
    h1 = jnp.maximum(h1, 0.0)
    y = jnp.dot(h1, w2_ref[...], preferred_element_type=jnp.float32) + b_2

    # --- second "residual" (module quirk: y + dropout(y)) + norm2 ---
    out = _layer_norm(y + y, g2, be2)

    o_ref[...] = out.astype(o_ref.dtype)


def transformer_viseme_forward(x_sbe, packed_params):
    """x_sbe: (S, B, E) float32 (PyTorch seq-first). Returns (S, B, E)."""
    S, B, Ee = x_sbe.shape
    # Seq-major flatten: pure reshape, no data movement, no extra HLO transpose.
    xt = x_sbe.reshape(S * B, Ee)

    vmem = pl.BlockSpec(memory_space=pltpu.MemorySpace.VMEM)  # whole array in VMEM
    out_t = pl.pallas_call(
        functools.partial(transformer_viseme_kernel, batch=B, num_heads=NUM_HEADS),
        out_shape=jax.ShapeDtypeStruct((S * B, Ee), x_sbe.dtype),
        in_specs=[vmem] * (1 + len(packed_params)),
        out_specs=vmem,
    )(xt, *packed_params)

    return out_t.reshape(S, B, Ee)


def init_params(key):
    """PyTorch-layout parameters (weights are (out_features, in_features))."""
    ks = jax.random.split(key, 8)
    s = 0.05
    in_proj_w = jax.random.normal(ks[0], (3 * E, E), jnp.float32) * s
    in_proj_b = jax.random.normal(ks[1], (3 * E,), jnp.float32) * s
    out_proj_w = jax.random.normal(ks[2], (E, E), jnp.float32) * s
    out_proj_b = jax.random.normal(ks[3], (E,), jnp.float32) * s
    w1 = jax.random.normal(ks[4], (H, E), jnp.float32) * s
    b1 = jax.random.normal(ks[5], (H,), jnp.float32) * s
    w2 = jax.random.normal(ks[6], (E, H), jnp.float32) * s
    b2 = jax.random.normal(ks[7], (E,), jnp.float32) * s
    g1 = jnp.ones((E,), jnp.float32)
    be1 = jnp.zeros((E,), jnp.float32)
    g2 = jnp.ones((E,), jnp.float32)
    be2 = jnp.zeros((E,), jnp.float32)
    return [in_proj_w, in_proj_b, out_proj_w, out_proj_b,
            w1, b1, w2, b2, g1, be1, g2, be2]


def pack_params(params):
    """Host-side (one-time) packing: pre-transpose weights to contracted-major and
    collapse everything into 3 slabs so the kernel prologue issues 4 DMAs total."""
    in_w, in_b, out_w, out_b, w1, b1, w2, b2, g1, be1, g2, be2 = params

    wa = jnp.concatenate([in_w.T, out_w.T, w1.T], axis=1)   # (E, 4E+H) = (32, 192)
    w2t = w2.T                                              # (H, E)    = (64, 32)

    def pad_row(v):
        return jnp.zeros((_BIAS_COLS,), jnp.float32).at[:v.shape[0]].set(v)

    bias = jnp.stack([pad_row(in_b), pad_row(out_b), pad_row(b1), pad_row(b2),
                      pad_row(g1), pad_row(be1), pad_row(g2), pad_row(be2)],
                     axis=0)                                 # (8, 96)

    return [wa, w2t, bias]


def reference_forward(x_sbe, params):
    """Pure-JAX reference matching PyTorch eval-mode semantics."""
    in_w, in_b, out_w, out_b, w1, b1, w2, b2, g1, be1, g2, be2 = params
    Ee = x_sbe.shape[-1]
    dh = Ee // NUM_HEADS
    x = jnp.transpose(x_sbe, (1, 0, 2))                      # (B, S, E)
    B, S, _ = x.shape

    qkv = jnp.einsum('bse,fe->bsf', x, in_w) + in_b
    q, k, v = qkv[..., :Ee], qkv[..., Ee:2 * Ee], qkv[..., 2 * Ee:]

    def split(t):
        return jnp.transpose(t.reshape(B, S, NUM_HEADS, dh), (0, 2, 1, 3))

    qh, kh, vh = split(q), split(k), split(v)
    s = jnp.einsum('bhqd,bhkd->bhqk', qh, kh) / jnp.sqrt(dh)
    p = jax.nn.softmax(s, axis=-1)
    o = jnp.einsum('bhqk,bhkd->bhqd', p, vh)
    o = jnp.transpose(o, (0, 2, 1, 3)).reshape(B, S, Ee)
    attn = jnp.einsum('bse,fe->bsf', o, out_w) + out_b

    def ln(t, g, b):
        mu = jnp.mean(t, -1, keepdims=True)
        var = jnp.mean((t - mu) ** 2, -1, keepdims=True)
        return (t - mu) / jnp.sqrt(var + LN_EPS) * g + b

    n1 = ln(x + attn, g1, be1)
    h1 = jax.nn.relu(jnp.einsum('bse,he->bsh', n1, w1) + b1)
    y = jnp.einsum('bsh,eh->bse', h1, w2) + b2
    out = ln(y + y, g2, be2)
    return jnp.transpose(out, (1, 0, 2))


if __name__ == "__main__":
    key = jax.random.PRNGKey(0)
    k_x, k_p = jax.random.split(key)
    # PyTorch nn.MultiheadAttention default layout: (seq, batch, embed)
    x = jax.random.normal(k_x, (SEQ_LEN, BATCH, INPUT_SIZE), jnp.float32)
    params = init_params(k_p)
    packed = pack_params(params)

    out = transformer_viseme_forward(x, packed)
    out = jax.block_until_ready(out)

    ref = reference_forward(x, params)
    assert out.shape == (SEQ_LEN, BATCH, INPUT_SIZE)
    # 1e-3 tolerance: pl.reciprocal(approx=True) in the softmax introduces
    # ~1e-4-level relative error relative to the exact-divide reference.
    assert jnp.allclose(out, ref, atol=1e-3, rtol=1e-3), "mismatch vs JAX reference"

    print("KERNEL_OK")
</pallas_src>

<mosaic_0001>
module attributes {stable_mosaic.version = 11 : i64} {
  func.func @transformer_viseme_kernel(%arg0: memref<16x32xf32, #tpu.memory_space<vmem>>, %arg1: memref<32x192xf32, #tpu.memory_space<vmem>>, %arg2: memref<64x32xf32, #tpu.memory_space<vmem>>, %arg3: memref<8x96xf32, #tpu.memory_space<vmem>>, %arg4: memref<16x32xf32, #tpu.memory_space<vmem>>) attributes {dimension_semantics = [], scalar_prefetch = 0 : i64, scratch_operands = 0 : i64, tpu.core_type = #tpu.core_type<tc>} {
    %c0 = arith.constant 0 : index
    %c0_0 = arith.constant 0 : index
    %0 = vector.load %arg0[%c0, %c0_0] : memref<16x32xf32, #tpu.memory_space<vmem>>, vector<16x32xf32>
    %c0_1 = arith.constant 0 : index
    %c0_2 = arith.constant 0 : index
    %1 = vector.load %arg1[%c0_1, %c0_2] : memref<32x192xf32, #tpu.memory_space<vmem>>, vector<32x192xf32>
    %c0_3 = arith.constant 0 : index
    %c0_4 = arith.constant 0 : index
    %2 = vector.load %arg3[%c0_3, %c0_4] : memref<8x96xf32, #tpu.memory_space<vmem>>, vector<8x96xf32>
    %3 = vector.extract_strided_slice %1 {offsets = [0, 0], sizes = [32, 96], strides = [1, 1]} : vector<32x192xf32> to vector<32x96xf32>
    %4 = vector.extract_strided_slice %1 {offsets = [0, 96], sizes = [32, 32], strides = [1, 1]} : vector<32x192xf32> to vector<32x32xf32>
    %5 = vector.extract_strided_slice %1 {offsets = [0, 128], sizes = [32, 64], strides = [1, 1]} : vector<32x192xf32> to vector<32x64xf32>
    %6 = vector.extract_strided_slice %2 {offsets = [0, 0], sizes = [1, 96], strides = [1, 1]} : vector<8x96xf32> to vector<1x96xf32>
    %7 = vector.extract_strided_slice %2 {offsets = [1, 0], sizes = [1, 32], strides = [1, 1]} : vector<8x96xf32> to vector<1x32xf32>
    %8 = vector.extract_strided_slice %2 {offsets = [2, 0], sizes = [1, 64], strides = [1, 1]} : vector<8x96xf32> to vector<1x64xf32>
    %9 = vector.extract_strided_slice %2 {offsets = [3, 0], sizes = [1, 32], strides = [1, 1]} : vector<8x96xf32> to vector<1x32xf32>
    %10 = vector.extract_strided_slice %2 {offsets = [4, 0], sizes = [1, 32], strides = [1, 1]} : vector<8x96xf32> to vector<1x32xf32>
    %11 = vector.extract_strided_slice %2 {offsets = [5, 0], sizes = [1, 32], strides = [1, 1]} : vector<8x96xf32> to vector<1x32xf32>
    %12 = vector.extract_strided_slice %2 {offsets = [6, 0], sizes = [1, 32], strides = [1, 1]} : vector<8x96xf32> to vector<1x32xf32>
    %13 = vector.extract_strided_slice %2 {offsets = [7, 0], sizes = [1, 32], strides = [1, 1]} : vector<8x96xf32> to vector<1x32xf32>
    %cst = arith.constant dense<0.000000e+00> : vector<16x96xf32>
    %14 = tpu.matmul %0, %3, %cst {dimension_numbers = #tpu.dot_dimension_numbers<[1], [0], [0], [1], [0, 0, 1, 1], [], []>} : vector<16x32xf32>, vector<32x96xf32>, vector<16x96xf32> -> vector<16x96xf32>
    %15 = vector.broadcast %6 : vector<1x96xf32> to vector<16x96xf32>
    %16 = arith.addf %14, %15 : vector<16x96xf32>
    %17 = vector.extract_strided_slice %16 {offsets = [0, 0], sizes = [16, 32], strides = [1, 1]} : vector<16x96xf32> to vector<16x32xf32>
    %18 = vector.extract_strided_slice %16 {offsets = [0, 32], sizes = [16, 32], strides = [1, 1]} : vector<16x96xf32> to vector<16x32xf32>
    %19 = vector.extract_strided_slice %16 {offsets = [0, 64], sizes = [16, 32], strides = [1, 1]} : vector<16x96xf32> to vector<16x32xf32>
    %20 = tpu.iota {dimensions = array<i32: 0>} : vector<16x16xi32>
    %c2_i32 = arith.constant 2 : i32
    %c0_i32 = arith.constant 0 : i32
    %21 = arith.cmpi eq, %c2_i32, %c0_i32 : i32
    %c1_i32 = arith.constant 1 : i32
    %22 = arith.select %21, %c1_i32, %c2_i32 : i32
    %23 = vector.broadcast %22 : i32 to vector<16x16xi32>
    %24 = arith.remsi %20, %23 : vector<16x16xi32>
    %c0_i32_5 = arith.constant 0 : i32
    %25 = vector.broadcast %c0_i32_5 : i32 to vector<16x16xi32>
    %26 = arith.cmpi ne, %24, %25 : vector<16x16xi32>
    %c0_i32_6 = arith.constant 0 : i32
    %27 = vector.broadcast %c0_i32_6 : i32 to vector<16x16xi32>
    %28 = arith.cmpi slt, %24, %27 : vector<16x16xi32>
    %c0_i32_7 = arith.constant 0 : i32
    %29 = arith.cmpi slt, %22, %c0_i32_7 : i32
    %30 = vector.broadcast %29 : i1 to vector<16x16xi1>
    %31 = vector.broadcast %30 : vector<16x16xi1> to vector<16x16xi1>
    %32 = arith.xori %28, %31 : vector<16x16xi1>
    %33 = arith.andi %32, %26 : vector<16x16xi1>
    %34 = vector.broadcast %22 : i32 to vector<16x16xi32>
    %35 = arith.addi %24, %34 : vector<16x16xi32>
    %36 = arith.select %33, %35, %24 : vector<16x16xi1>, vector<16x16xi32>
    %37 = tpu.iota {dimensions = array<i32: 1>} : vector<16x16xi32>
    %c2_i32_8 = arith.constant 2 : i32
    %c0_i32_9 = arith.constant 0 : i32
    %38 = arith.cmpi eq, %c2_i32_8, %c0_i32_9 : i32
    %c1_i32_10 = arith.constant 1 : i32
    %39 = arith.select %38, %c1_i32_10, %c2_i32_8 : i32
    %40 = vector.broadcast %39 : i32 to vector<16x16xi32>
    %41 = arith.remsi %37, %40 : vector<16x16xi32>
    %c0_i32_11 = arith.constant 0 : i32
    %42 = vector.broadcast %c0_i32_11 : i32 to vector<16x16xi32>
    %43 = arith.cmpi ne, %41, %42 : vector<16x16xi32>
    %c0_i32_12 = arith.constant 0 : i32
    %44 = vector.broadcast %c0_i32_12 : i32 to vector<16x16xi32>
    %45 = arith.cmpi slt, %41, %44 : vector<16x16xi32>
    %c0_i32_13 = arith.constant 0 : i32
    %46 = arith.cmpi slt, %39, %c0_i32_13 : i32
    %47 = vector.broadcast %46 : i1 to vector<16x16xi1>
    %48 = vector.broadcast %47 : vector<16x16xi1> to vector<16x16xi1>
    %49 = arith.xori %45, %48 : vector<16x16xi1>
    %50 = arith.andi %49, %43 : vector<16x16xi1>
    %51 = vector.broadcast %39 : i32 to vector<16x16xi32>
    %52 = arith.addi %41, %51 : vector<16x16xi32>
    %53 = arith.select %50, %52, %41 : vector<16x16xi1>, vector<16x16xi32>
    %54 = arith.cmpi eq, %36, %53 : vector<16x16xi32>
    %cst_14 = arith.constant 0.000000e+00 : f32
    %cst_15 = arith.constant -1.000000e+30 : f32
    %55 = vector.broadcast %cst_14 : f32 to vector<16x16xf32>
    %56 = vector.broadcast %cst_15 : f32 to vector<16x16xf32>
    %57 = arith.select %54, %55, %56 : vector<16x16xi1>, vector<16x16xf32>
    %58 = vector.extract_strided_slice %17 {offsets = [0, 0], sizes = [16, 8], strides = [1, 1]} : vector<16x32xf32> to vector<16x8xf32>
    %59 = vector.extract_strided_slice %18 {offsets = [0, 0], sizes = [16, 8], strides = [1, 1]} : vector<16x32xf32> to vector<16x8xf32>
    %60 = vector.extract_strided_slice %19 {offsets = [0, 0], sizes = [16, 8], strides = [1, 1]} : vector<16x32xf32> to vector<16x8xf32>
    %cst_16 = arith.constant dense<0.000000e+00> : vector<16x16xf32>
    %61 = tpu.matmul %58, %59, %cst_16 {dimension_numbers = #tpu.dot_dimension_numbers<[1], [1], [0], [0], [0, 0, 1, 0], [], []>} : vector<16x8xf32>, vector<16x8xf32>, vector<16x16xf32> -> vector<16x16xf32>
    %cst_17 = arith.constant 0.353553385 : f32
    %62 = vector.broadcast %cst_17 : f32 to vector<16x16xf32>
    %63 = arith.mulf %61, %62 : vector<16x16xf32>
    %64 = arith.addf %63, %57 : vector<16x16xf32>
    %cst_18 = arith.constant dense<0xFF800000> : vector<16xf32>
    %65 = vector.multi_reduction <maximumf>, %64, %cst_18 [1] : vector<16x16xf32> to vector<16xf32>
    %66 = vector.shape_cast %65 : vector<16xf32> to vector<16x1xf32>
    %67 = vector.broadcast %66 : vector<16x1xf32> to vector<16x16xf32>
    %68 = arith.subf %64, %67 : vector<16x16xf32>
    %69 = math.exp %68 : vector<16x16xf32>
    %cst_19 = arith.constant dense<0.000000e+00> : vector<16xf32>
    %70 = vector.multi_reduction <add>, %69, %cst_19 [1] : vector<16x16xf32> to vector<16xf32>
    %71 = vector.shape_cast %70 : vector<16xf32> to vector<16x1xf32>
    %72 = tpu.reciprocal %71 {approx = true} : vector<16x1xf32> -> vector<16x1xf32>
    %73 = vector.broadcast %72 : vector<16x1xf32> to vector<16x16xf32>
    %74 = arith.mulf %69, %73 : vector<16x16xf32>
    %cst_20 = arith.constant dense<0.000000e+00> : vector<16x8xf32>
    %75 = tpu.matmul %74, %60, %cst_20 {dimension_numbers = #tpu.dot_dimension_numbers<[1], [0], [0], [1], [0, 0, 1, 1], [], []>} : vector<16x16xf32>, vector<16x8xf32>, vector<16x8xf32> -> vector<16x8xf32>
    %76 = vector.extract_strided_slice %17 {offsets = [0, 8], sizes = [16, 8], strides = [1, 1]} : vector<16x32xf32> to vector<16x8xf32>
    %77 = vector.extract_strided_slice %18 {offsets = [0, 8], sizes = [16, 8], strides = [1, 1]} : vector<16x32xf32> to vector<16x8xf32>
    %78 = vector.extract_strided_slice %19 {offsets = [0, 8], sizes = [16, 8], strides = [1, 1]} : vector<16x32xf32> to vector<16x8xf32>
    %cst_21 = arith.constant dense<0.000000e+00> : vector<16x16xf32>
    %79 = tpu.matmul %76, %77, %cst_21 {dimension_numbers = #tpu.dot_dimension_numbers<[1], [1], [0], [0], [0, 0, 1, 0], [], []>} : vector<16x8xf32>, vector<16x8xf32>, vector<16x16xf32> -> vector<16x16xf32>
    %cst_22 = arith.constant 0.353553385 : f32
    %80 = vector.broadcast %cst_22 : f32 to vector<16x16xf32>
    %81 = arith.mulf %79, %80 : vector<16x16xf32>
    %82 = arith.addf %81, %57 : vector<16x16xf32>
    %cst_23 = arith.constant dense<0xFF800000> : vector<16xf32>
    %83 = vector.multi_reduction <maximumf>, %82, %cst_23 [1] : vector<16x16xf32> to vector<16xf32>
    %84 = vector.shape_cast %83 : vector<16xf32> to vector<16x1xf32>
    %85 = vector.broadcast %84 : vector<16x1xf32> to vector<16x16xf32>
    %86 = arith.subf %82, %85 : vector<16x16xf32>
    %87 = math.exp %86 : vector<16x16xf32>
    %cst_24 = arith.constant dense<0.000000e+00> : vector<16xf32>
    %88 = vector.multi_reduction <add>, %87, %cst_24 [1] : vector<16x16xf32> to vector<16xf32>
    %89 = vector.shape_cast %88 : vector<16xf32> to vector<16x1xf32>
    %90 = tpu.reciprocal %89 {approx = true} : vector<16x1xf32> -> vector<16x1xf32>
    %91 = vector.broadcast %90 : vector<16x1xf32> to vector<16x16xf32>
    %92 = arith.mulf %87, %91 : vector<16x16xf32>
    %cst_25 = arith.constant dense<0.000000e+00> : vector<16x8xf32>
    %93 = tpu.matmul %92, %78, %cst_25 {dimension_numbers = #tpu.dot_dimension_numbers<[1], [0], [0], [1], [0, 0, 1, 1], [], []>} : vector<16x16xf32>, vector<16x8xf32>, vector<16x8xf32> -> vector<16x8xf32>
    %94 = vector.extract_strided_slice %17 {offsets = [0, 16], sizes = [16, 8], strides = [1, 1]} : vector<16x32xf32> to vector<16x8xf32>
    %95 = vector.extract_strided_slice %18 {offsets = [0, 16], sizes = [16, 8], strides = [1, 1]} : vector<16x32xf32> to vector<16x8xf32>
    %96 = vector.extract_strided_slice %19 {offsets = [0, 16], sizes = [16, 8], strides = [1, 1]} : vector<16x32xf32> to vector<16x8xf32>
    %cst_26 = arith.constant dense<0.000000e+00> : vector<16x16xf32>
    %97 = tpu.matmul %94, %95, %cst_26 {dimension_numbers = #tpu.dot_dimension_numbers<[1], [1], [0], [0], [0, 0, 1, 0], [], []>} : vector<16x8xf32>, vector<16x8xf32>, vector<16x16xf32> -> vector<16x16xf32>
    %cst_27 = arith.constant 0.353553385 : f32
    %98 = vector.broadcast %cst_27 : f32 to vector<16x16xf32>
    %99 = arith.mulf %97, %98 : vector<16x16xf32>
    %100 = arith.addf %99, %57 : vector<16x16xf32>
    %cst_28 = arith.constant dense<0xFF800000> : vector<16xf32>
    %101 = vector.multi_reduction <maximumf>, %100, %cst_28 [1] : vector<16x16xf32> to vector<16xf32>
    %102 = vector.shape_cast %101 : vector<16xf32> to vector<16x1xf32>
    %103 = vector.broadcast %102 : vector<16x1xf32> to vector<16x16xf32>
    %104 = arith.subf %100, %103 : vector<16x16xf32>
    %105 = math.exp %104 : vector<16x16xf32>
    %cst_29 = arith.constant dense<0.000000e+00> : vector<16xf32>
    %106 = vector.multi_reduction <add>, %105, %cst_29 [1] : vector<16x16xf32> to vector<16xf32>
    %107 = vector.shape_cast %106 : vector<16xf32> to vector<16x1xf32>
    %108 = tpu.reciprocal %107 {approx = true} : vector<16x1xf32> -> vector<16x1xf32>
    %109 = vector.broadcast %108 : vector<16x1xf32> to vector<16x16xf32>
    %110 = arith.mulf %105, %109 : vector<16x16xf32>
    %cst_30 = arith.constant dense<0.000000e+00> : vector<16x8xf32>
    %111 = tpu.matmul %110, %96, %cst_30 {dimension_numbers = #tpu.dot_dimension_numbers<[1], [0], [0], [1], [0, 0, 1, 1], [], []>} : vector<16x16xf32>, vector<16x8xf32>, vector<16x8xf32> -> vector<16x8xf32>
    %112 = vector.extract_strided_slice %17 {offsets = [0, 24], sizes = [16, 8], strides = [1, 1]} : vector<16x32xf32> to vector<16x8xf32>
    %113 = vector.extract_strided_slice %18 {offsets = [0, 24], sizes = [16, 8], strides = [1, 1]} : vector<16x32xf32> to vector<16x8xf32>
    %114 = vector.extract_strided_slice %19 {offsets = [0, 24], sizes = [16, 8], strides = [1, 1]} : vector<16x32xf32> to vector<16x8xf32>
    %cst_31 = arith.constant dense<0.000000e+00> : vector<16x16xf32>
    %115 = tpu.matmul %112, %113, %cst_31 {dimension_numbers = #tpu.dot_dimension_numbers<[1], [1], [0], [0], [0, 0, 1, 0], [], []>} : vector<16x8xf32>, vector<16x8xf32>, vector<16x16xf32> -> vector<16x16xf32>
    %cst_32 = arith.constant 0.353553385 : f32
    %116 = vector.broadcast %cst_32 : f32 to vector<16x16xf32>
    %117 = arith.mulf %115, %116 : vector<16x16xf32>
    %118 = arith.addf %117, %57 : vector<16x16xf32>
    %cst_33 = arith.constant dense<0xFF800000> : vector<16xf32>
    %119 = vector.multi_reduction <maximumf>, %118, %cst_33 [1] : vector<16x16xf32> to vector<16xf32>
    %120 = vector.shape_cast %119 : vector<16xf32> to vector<16x1xf32>
    %121 = vector.broadcast %120 : vector<16x1xf32> to vector<16x16xf32>
    %122 = arith.subf %118, %121 : vector<16x16xf32>
    %123 = math.exp %122 : vector<16x16xf32>
    %cst_34 = arith.constant dense<0.000000e+00> : vector<16xf32>
    %124 = vector.multi_reduction <add>, %123, %cst_34 [1] : vector<16x16xf32> to vector<16xf32>
    %125 = vector.shape_cast %124 : vector<16xf32> to vector<16x1xf32>
    %126 = tpu.reciprocal %125 {approx = true} : vector<16x1xf32> -> vector<16x1xf32>
    %127 = vector.broadcast %126 : vector<16x1xf32> to vector<16x16xf32>
    %128 = arith.mulf %123, %127 : vector<16x16xf32>
    %cst_35 = arith.constant dense<0.000000e+00> : vector<16x8xf32>
    %129 = tpu.matmul %128, %114, %cst_35 {dimension_numbers = #tpu.dot_dimension_numbers<[1], [0], [0], [1], [0, 0, 1, 1], [], []>} : vector<16x16xf32>, vector<16x8xf32>, vector<16x8xf32> -> vector<16x8xf32>
    %130 = tpu.concatenate %75, %93, %111, %129 in 1 : vector<16x8xf32>, vector<16x8xf32>, vector<16x8xf32>, vector<16x8xf32> -> vector<16x32xf32>
    %cst_36 = arith.constant dense<0.000000e+00> : vector<16x32xf32>
    %131 = tpu.matmul %130, %4, %cst_36 {dimension_numbers = #tpu.dot_dimension_numbers<[1], [0], [0], [1], [0, 0, 1, 1], [], []>} : vector<16x32xf32>, vector<32x32xf32>, vector<16x32xf32> -> vector<16x32xf32>
    %132 = vector.broadcast %7 : vector<1x32xf32> to vector<16x32xf32>
    %133 = arith.addf %131, %132 : vector<16x32xf32>
    %134 = arith.addf %0, %133 : vector<16x32xf32>
    %cst_37 = arith.constant dense<0.000000e+00> : vector<16xf32>
    %135 = vector.multi_reduction <add>, %134, %cst_37 [1] : vector<16x32xf32> to vector<16xf32>
    %136 = vector.shape_cast %135 : vector<16xf32> to vector<16x1xf32>
    %cst_38 = arith.constant 3.200000e+01 : f32
    %137 = vector.broadcast %cst_38 : f32 to vector<16x1xf32>
    %138 = arith.divf %136, %137 : vector<16x1xf32>
    %139 = vector.broadcast %138 : vector<16x1xf32> to vector<16x32xf32>
    %140 = arith.subf %134, %139 : vector<16x32xf32>
    %141 = arith.mulf %140, %140 : vector<16x32xf32>
    %cst_39 = arith.constant dense<0.000000e+00> : vector<16xf32>
    %142 = vector.multi_reduction <add>, %141, %cst_39 [1] : vector<16x32xf32> to vector<16xf32>
    %143 = vector.shape_cast %142 : vector<16xf32> to vector<16x1xf32>
    %cst_40 = arith.constant 3.200000e+01 : f32
    %144 = vector.broadcast %cst_40 : f32 to vector<16x1xf32>
    %145 = arith.divf %143, %144 : vector<16x1xf32>
    %146 = vector.broadcast %138 : vector<16x1xf32> to vector<16x32xf32>
    %147 = arith.subf %134, %146 : vector<16x32xf32>
    %cst_41 = arith.constant 9.99999974E-6 : f32
    %148 = vector.broadcast %cst_41 : f32 to vector<16x1xf32>
    %149 = arith.addf %145, %148 : vector<16x1xf32>
    %150 = math.rsqrt %149 : vector<16x1xf32>
    %151 = vector.broadcast %150 : vector<16x1xf32> to vector<16x32xf32>
    %152 = arith.mulf %147, %151 : vector<16x32xf32>
    %153 = vector.broadcast %10 : vector<1x32xf32> to vector<16x32xf32>
    %154 = arith.mulf %152, %153 : vector<16x32xf32>
    %155 = vector.broadcast %11 : vector<1x32xf32> to vector<16x32xf32>
    %156 = arith.addf %154, %155 : vector<16x32xf32>
    %cst_42 = arith.constant dense<0.000000e+00> : vector<16x64xf32>
    %157 = tpu.matmul %156, %5, %cst_42 {dimension_numbers = #tpu.dot_dimension_numbers<[1], [0], [0], [1], [0, 0, 1, 1], [], []>} : vector<16x32xf32>, vector<32x64xf32>, vector<16x64xf32> -> vector<16x64xf32>
    %158 = vector.broadcast %8 : vector<1x64xf32> to vector<16x64xf32>
    %159 = arith.addf %157, %158 : vector<16x64xf32>
    %cst_43 = arith.constant 0.000000e+00 : f32
    %160 = vector.broadcast %cst_43 : f32 to vector<16x64xf32>
    %161 = arith.maximumf %159, %160 : vector<16x64xf32>
    %c0_44 = arith.constant 0 : index
    %c0_45 = arith.constant 0 : index
    %162 = vector.load %arg2[%c0_44, %c0_45] : memref<64x32xf32, #tpu.memory_space<vmem>>, vector<64x32xf32>
    %cst_46 = arith.constant dense<0.000000e+00> : vector<16x32xf32>
    %163 = tpu.matmul %161, %162, %cst_46 {dimension_numbers = #tpu.dot_dimension_numbers<[1], [0], [0], [1], [0, 0, 1, 1], [], []>} : vector<16x64xf32>, vector<64x32xf32>, vector<16x32xf32> -> vector<16x32xf32>
    %164 = vector.broadcast %9 : vector<1x32xf32> to vector<16x32xf32>
    %165 = arith.addf %163, %164 : vector<16x32xf32>
    %166 = arith.addf %165, %165 : vector<16x32xf32>
    %cst_47 = arith.constant dense<0.000000e+00> : vector<16xf32>
    %167 = vector.multi_reduction <add>, %166, %cst_47 [1] : vector<16x32xf32> to vector<16xf32>
    %168 = vector.shape_cast %167 : vector<16xf32> to vector<16x1xf32>
    %cst_48 = arith.constant 3.200000e+01 : f32
    %169 = vector.broadcast %cst_48 : f32 to vector<16x1xf32>
    %170 = arith.divf %168, %169 : vector<16x1xf32>
    %171 = vector.broadcast %170 : vector<16x1xf32> to vector<16x32xf32>
    %172 = arith.subf %166, %171 : vector<16x32xf32>
    %173 = arith.mulf %172, %172 : vector<16x32xf32>
    %cst_49 = arith.constant dense<0.000000e+00> : vector<16xf32>
    %174 = vector.multi_reduction <add>, %173, %cst_49 [1] : vector<16x32xf32> to vector<16xf32>
    %175 = vector.shape_cast %174 : vector<16xf32> to vector<16x1xf32>
    %cst_50 = arith.constant 3.200000e+01 : f32
    %176 = vector.broadcast %cst_50 : f32 to vector<16x1xf32>
    %177 = arith.divf %175, %176 : vector<16x1xf32>
    %178 = vector.broadcast %170 : vector<16x1xf32> to vector<16x32xf32>
    %179 = arith.subf %166, %178 : vector<16x32xf32>
    %cst_51 = arith.constant 9.99999974E-6 : f32
    %180 = vector.broadcast %cst_51 : f32 to vector<16x1xf32>
    %181 = arith.addf %177, %180 : vector<16x1xf32>
    %182 = math.rsqrt %181 : vector<16x1xf32>
    %183 = vector.broadcast %182 : vector<16x1xf32> to vector<16x32xf32>
    %184 = arith.mulf %179, %183 : vector<16x32xf32>
    %185 = vector.broadcast %12 : vector<1x32xf32> to vector<16x32xf32>
    %186 = arith.mulf %184, %185 : vector<16x32xf32>
    %187 = vector.broadcast %13 : vector<1x32xf32> to vector<16x32xf32>
    %188 = arith.addf %186, %187 : vector<16x32xf32>
    %c0_52 = arith.constant 0 : index
    %c0_53 = arith.constant 0 : index
    %189 = vector.load %arg4[%c0_52, %c0_53] : memref<16x32xf32, #tpu.memory_space<vmem>>, vector<16x32xf32>
    tpu.vector_store %arg4[%c0_52, %c0_53], %188 {strides = array<i32>} : memref<16x32xf32, #tpu.memory_space<vmem>>, vector<16x32xf32>,
    return
  }
}

</mosaic_0001>

<llo_original>
// kernel: tpu_custom_call.1
$region0: #{tpu_custom_call.1}
  #allocation0 [shape = 'u32[]', space=smem, size = 0x4, offset = 0x4, fixed_abs, tag = 'smem constant byte address 0x4 - core index']
  #allocation1 [shape = 'u32[144,128]{1,0:T(1,128)}', space=vmem, size = 0x12000, scoped, tag = 'internal scratch']
  %s0 = inlined_call_operand.vmem [shape: f32[16,32], index: 0, kind: input, shape index: {}]
  %s1 = inlined_call_operand.vmem [shape: f32[32,192], index: 1, kind: input, shape index: {}]
  %s2 = inlined_call_operand.vmem [shape: f32[64,32], index: 2, kind: input, shape index: {}]
  %s3 = inlined_call_operand.vmem [shape: f32[8,96], index: 3, kind: input, shape index: {}]
  %s4 = inlined_call_operand.hbm [shape: f32[16,32], index: 4, kind: output, shape index: {}]
  %s5 = sld [smem:[#allocation0]]
  $region26: #{tpu_custom_call.1} parent=0
    _
  %s7 = ssub.s32 1, %s5
  %s8 = scalar_select 0, %s7, %s5
  $region1: #{tpu_custom_call.1} parent=0
    #allocation2 [shape = 'u8[8192]{0}', space=vmem, size = 0x2000, scoped, tag = 'output window, operand 0, single buffered']
    #allocation3 [shape = 's32[1]{0}', space=sflag, size = 0x4, scoped, tag = 'scoped memory for tpu_custom_call.1']
    %9 = vsyncpa [#allocation3], 0
    // Predicated region
    $region2: #{tpu_custom_call.1} parent=1 // pred_check
      _
    $region3: #{tpu_custom_call.1} parent=1 // pred_check_branch
      %11 = sbr.rel (0) target = $region5
    $region4: #{tpu_custom_call.1} parent=1 // pred_region
      _
    $region5: #{tpu_custom_call.1} parent=1 // pred_fallthru
      _
    // Predicated region
    $region6: #{tpu_custom_call.1} parent=1 // pred_check
      _
    $region7: #{tpu_custom_call.1} parent=1 // pred_check_branch
      %13 = sbr.rel (0) target = $region9
    $region8: #{tpu_custom_call.1} parent=1 // pred_region
      _
    $region9: #{tpu_custom_call.1} parent=1 // pred_fallthru
      _
    // Predicated region
    $region10: #{tpu_custom_call.1} parent=1 // pred_check
      _
    $region11: #{tpu_custom_call.1} parent=1 // pred_check_branch
      %15 = sbr.rel (0) target = $region13
    $region12: #{tpu_custom_call.1} parent=1 // pred_region
      _
    $region13: #{tpu_custom_call.1} parent=1 // pred_fallthru
      _
    // Predicated region
    $region14: #{tpu_custom_call.1} parent=1 // pred_check
      _
    $region15: #{tpu_custom_call.1} parent=1 // pred_check_branch
      %17 = sbr.rel (0) target = $region17
    $region16: #{tpu_custom_call.1} parent=1 // pred_region
      _
    $region17: #{tpu_custom_call.1} parent=1 // pred_fallthru
      _
    %v18 = vld [vmem:[%s0] sm:$0xff]
    %v19 = vld [vmem:[%s0 + $0x8] sm:$0xff]
    %v20 = vld [vmem:[%s1] sm:$0xff]
    %v21 = vld [vmem:[%s1 + $0x8] sm:$0xff]
    %v22 = vld [vmem:[%s1 + $0x10] sm:$0xff]
    %v23 = vld [vmem:[%s1 + $0x18] sm:$0xff]
    %v24 = vld [vmem:[%s1 + $0x20] sm:$0xff]
    %v25 = vld [vmem:[%s1 + $0x28] sm:$0xff]
    %v26 = vld [vmem:[%s1 + $0x30] sm:$0xff]
    %v27 = vld [vmem:[%s1 + $0x38] sm:$0xff]
    %v28 = vld [vmem:[%s3] sm:$0xff]
    %v29 = vlaneseq
    %v30 = vshrl.u32 %v29, 7
    %v31 = vsub.s32 0, %v30
    %v32 = vrot.slane %v28, %v31
    %vm33 = vcmask 261120
    %v35 = vsel %vm33, %v18, 0
    %v38 = vsel %vm33, %v19, 0
    %40 = vmatprep.subr.mxu0 0.0
    %41 = vmatpush1.msra.mxu0 0.0
    %42 = vmatprep.subr.mxu0 0.0
    %43 = vmatpush1.msra.mxu0 0.0
    %44 = vmatprep.subr.mxu0 0.0
    %45 = vmatpush1.msra.mxu0 0.0
    %46 = vmatprep.subr.mxu0 0.0
    %47 = vmatpush1.msra.mxu0 0.0
    %48 = vmatprep.subr.mxu0 0.0
    %49 = vmatpush1.msra.mxu0 0.0
    %50 = vmatprep.subr.mxu0 0.0
    %51 = vmatpush1.msra.mxu0 0.0
    %52 = vmatprep.subr.mxu0 0.0
    %53 = vmatpush1.msra.mxu0 0.0
    %54 = vmatprep.subr.mxu0 0.0
    %55 = vmatpush1.msra.mxu0 0.0
    %56 = vmatprep.subr.mxu0 0.0
    %57 = vmatpush1.msra.mxu0 0.0
    %58 = vmatprep.subr.mxu0 0.0
    %59 = vmatpush1.msra.mxu0 0.0
    %60 = vmatprep.subr.mxu0 0.0
    %61 = vmatpush1.msra.mxu0 0.0
    %62 = vmatprep.subr.mxu0 0.0
    %63 = vmatpush1.msra.mxu0 0.0
    %64 = vmatprep.subr.mxu0 0.0
    %65 = vmatpush1.msra.mxu0 %v26
    %66 = vmatprep.subr.mxu0 0.0
    %67 = vmatpush1.msra.mxu0 %v24
    %68 = vmatprep.subr.mxu0 0.0
    %69 = vmatpush1.msra.mxu0 %v22
    %70 = vmatprep.subr.mxu0 0.0
    %71 = vmatpush1.msra.mxu0 %v20
    %72 = vmatprep.subr.mxu0 0.0
    %73 = vmatpush2.msra.mxu0 0.0
    %74 = vmatprep.subr.mxu0 0.0
    %75 = vmatpush2.msra.mxu0 0.0
    %76 = vmatprep.subr.mxu0 0.0
    %77 = vmatpush2.msra.mxu0 0.0
    %78 = vmatprep.subr.mxu0 0.0
    %79 = vmatpush2.msra.mxu0 0.0
    %80 = vmatprep.subr.mxu0 0.0
    %81 = vmatpush2.msra.mxu0 0.0
    %82 = vmatprep.subr.mxu0 0.0
    %83 = vmatpush2.msra.mxu0 0.0
    %84 = vmatprep.subr.mxu0 0.0
    %85 = vmatpush2.msra.mxu0 0.0
    %86 = vmatprep.subr.mxu0 0.0
    %87 = vmatpush2.msra.mxu0 0.0
    %88 = vmatprep.subr.mxu0 0.0
    %89 = vmatpush2.msra.mxu0 0.0
    %90 = vmatprep.subr.mxu0 0.0
    %91 = vmatpush2.msra.mxu0 0.0
    %92 = vmatprep.subr.mxu0 0.0
    %93 = vmatpush2.msra.mxu0 0.0
    %94 = vmatprep.subr.mxu0 0.0
    %95 = vmatpush2.msra.mxu0 0.0
    %96 = vmatprep.subr.mxu0 0.0
    %97 = vmatpush2.msra.mxu0 0.0
    %98 = vmatprep.subr.mxu0 0.0
    %99 = vmatpush2.msra.mxu0 0.0
    %100 = vmatprep.subr.mxu0 0.0
    %101 = vmatpush2.msra.mxu0 0.0
    %102 = vmatprep.subr.mxu0 0.0
    %103 = vmatpush2.msra.mxu0 0.0
    %104 = vmatprep.mubr.f32.mxu0 0.0
    %105 = vmatmul.mubr.f32.gmra.mxu0 %v35
    %v106 = vpop.f32.mrf.mxu0
    %v107 = vadd.f32 %v32, %v106
    %v108 = vpop.f32.mrf.mxu0
    %109 = vmatprep.mubr.f32.mxu0 0.0
    %110 = vmatmul.mubr.f32.gmra.mxu0 %v38
    %v111 = vpop.f32.mrf.mxu0
    %v112 = vadd.f32 %v32, %v111
    %v113 = vpop.f32.mrf.mxu0
    %114 = vdwg.mxu0
    %v115 = vlaneseq
    %v116 = vshrl.u32 %v115, 7
    %v117 = vadd.s32 %v116, 8
    %vm118 = vcmp.lt.s32.totalorder %v116, 0
    %v119 = vsub.s32 0, %v116
    %v120 = vsel %vm118, %v119, %v116
    %v121 = vshrl.u32 %v120, 1
    %v122 = vand.u32 %v120, 1
    %v123 = vsub.s32 0, %v122
    %v124 = vsel %vm118, %v123, %v122
    %vm125 = vcmp.lt.s32.totalorder %v117, 0
    %v126 = vsub.s32 0, %v117
    %v127 = vsel %vm125, %v126, %v117
    %v128 = vshrl.u32 %v127, 1
    %v129 = vand.u32 %v127, 1
    %v130 = vsub.s32 0, %v129
    %v131 = vsel %vm125, %v130, %v129
    %vm132 = vcmp.ne.s32.totalorder %v124, 0
    %vm133 = vcmp.ne.s32.totalorder %v131, 0
    %vm134 = vcmp.lt.s32.totalorder %v124, 0
    %vm135 = vcmp.lt.s32.totalorder %v131, 0
    %vm136 = vmand %vm134, %vm132
    %vm137 = vmand %vm135, %vm133
    %v138 = vadd.s32 %v124, 2
    %v139 = vadd.s32 %v131, 2
    %v140 = vsel %vm136, %v138, %v124
    %v141 = vsel %vm137, %v139, %v131
    %v142 = vlaneseq
    %v143 = vand.u32 %v142, 127
    %vm144 = vcmp.lt.s32.totalorder %v143, 0
    %v145 = vsub.s32 0, %v143
    %v146 = vsel %vm144, %v145, %v143
    %v147 = vshrl.u32 %v146, 1
    %v148 = vand.u32 %v146, 1
    %v149 = vsub.s32 0, %v148
    %v150 = vsel %vm144, %v149, %v148
    %vm151 = vcmp.ne.s32.totalorder %v150, 0
    %vm152 = vcmp.lt.s32.totalorder %v150, 0
    %vm153 = vmand %vm152, %vm151
    %v154 = vadd.s32 %v150, 2
    %v155 = vsel %vm153, %v154, %v150
    %vm156 = vcmp.eq.s32.totalorder %v140, %v155
    %vm157 = vcmp.eq.s32.totalorder %v141, %v155
    %v158 = vsel %vm156, 0.0, -1e+30
    %v159 = vsel %vm157, 0.0, -1e+30
    %162 = vrot.lane.b32.xlu0 %v107, 96
    %v163 = vpop.permute.xlu0 %162
    %164 = vrot.lane.b32.xlu0 %v112, 96
    %v165 = vpop.permute.xlu0 %164
    %vm166 = vcmask 64512
    %v167 = vsel %vm166, %v107, 0
    %v169 = vsel %vm166, %v112, 0
    %v171 = vsel %vm166, %v163, 0
    %v173 = vsel %vm166, %v165, 0
    %175 = vmatprep.subr.mxu0 0.0
    %176 = vmatpush1.xpose.msra.mxu0 0.0
    %177 = vmatprep.subr.mxu0 0.0
    %178 = vmatpush1.xpose.msra.mxu0 0.0
    %179 = vmatprep.subr.mxu0 0.0
    %180 = vmatpush1.xpose.msra.mxu0 0.0
    %181 = vmatprep.subr.mxu0 0.0
    %182 = vmatpush1.xpose.msra.mxu0 0.0
    %183 = vmatprep.subr.mxu0 0.0
    %184 = vmatpush1.xpose.msra.mxu0 0.0
    %185 = vmatprep.subr.mxu0 0.0
    %186 = vmatpush1.xpose.msra.mxu0 0.0
    %187 = vmatprep.subr.mxu0 0.0
    %188 = vmatpush1.xpose.msra.mxu0 0.0
    %189 = vmatprep.subr.mxu0 0.0
    %190 = vmatpush1.xpose.msra.mxu0 0.0
    %191 = vmatprep.subr.mxu0 0.0
    %192 = vmatpush1.xpose.msra.mxu0 0.0
    %193 = vmatprep.subr.mxu0 0.0
    %194 = vmatpush1.xpose.msra.mxu0 0.0
    %195 = vmatprep.subr.mxu0 0.0
    %196 = vmatpush1.xpose.msra.mxu0 0.0
    %197 = vmatprep.subr.mxu0 0.0
    %198 = vmatpush1.xpose.msra.mxu0 0.0
    %199 = vmatprep.subr.mxu0 0.0
    %200 = vmatpush1.xpose.msra.mxu0 0.0
    %201 = vmatprep.subr.mxu0 0.0
    %202 = vmatpush1.xpose.msra.mxu0 0.0
    %203 = vmatprep.subr.mxu0 0.0
    %204 = vmatpush1.xpose.msra.mxu0 %v173
    %205 = vmatprep.subr.mxu0 0.0
    %206 = vmatpush1.xpose.msra.mxu0 %v171
    %207 = vmatprep.subr.mxu0 0.0
    %208 = vmatpush2.xpose.msra.mxu0 0.0
    %209 = vmatprep.subr.mxu0 0.0
    %210 = vmatpush2.xpose.msra.mxu0 0.0
    %211 = vmatprep.subr.mxu0 0.0
    %212 = vmatpush2.xpose.msra.mxu0 0.0
    %213 = vmatprep.subr.mxu0 0.0
    %214 = vmatpush2.xpose.msra.mxu0 0.0
    %215 = vmatprep.subr.mxu0 0.0
    %216 = vmatpush2.xpose.msra.mxu0 0.0
    %217 = vmatprep.subr.mxu0 0.0
    %218 = vmatpush2.xpose.msra.mxu0 0.0
    %219 = vmatprep.subr.mxu0 0.0
    %220 = vmatpush2.xpose.msra.mxu0 0.0
    %221 = vmatprep.subr.mxu0 0.0
    %222 = vmatpush2.xpose.msra.mxu0 0.0
    %223 = vmatprep.subr.mxu0 0.0
    %224 = vmatpush2.xpose.msra.mxu0 0.0
    %225 = vmatprep.subr.mxu0 0.0
    %226 = vmatpush2.xpose.msra.mxu0 0.0
    %227 = vmatprep.subr.mxu0 0.0
    %228 = vmatpush2.xpose.msra.mxu0 0.0
    %229 = vmatprep.subr.mxu0 0.0
    %230 = vmatpush2.xpose.msra.mxu0 0.0
    %231 = vmatprep.subr.mxu0 0.0
    %232 = vmatpush2.xpose.msra.mxu0 0.0
    %233 = vmatprep.subr.mxu0 0.0
    %234 = vmatpush2.xpose.msra.mxu0 0.0
    %235 = vmatprep.subr.mxu0 0.0
    %236 = vmatpush2.xpose.msra.mxu0 0.0
    %237 = vmatprep.subr.mxu0 0.0
    %238 = vmatpush2.xpose.msra.mxu0 0.0
    %239 = vmatprep.mubr.f32.mxu0 0.0
    %240 = vmatmul.mubr.f32.gmra.mxu0 %v167
    %v241 = vpop.f32.mrf.mxu0
    %v242 = vadd.f32 0.0, %v241
    %v243 = vpop.f32.mrf.mxu0
    %244 = vmatprep.mubr.f32.mxu0 0.0
    %245 = vmatmul.mubr.f32.gmra.mxu0 %v169
    %v246 = vpop.f32.mrf.mxu0
    %v247 = vadd.f32 0.0, %v246
    %v248 = vpop.f32.mrf.mxu0
    %249 = vdwg.mxu0
    %v250 = vmul.f32 %v242, 0.35355338
    %v251 = vmul.f32 %v247, 0.35355338
    %v252 = vadd.f32 %v250, %v158
    %v253 = vadd.f32 %v251, %v159
    %vm254 = vcmask 130048
    %v255 = vsel %vm254, %v252, -inf
    %256 = vmax.xlane.f32.xlu0 %v255
    %v257 = vpop.xlane.xlu0 %256
    %v258 = vsel %vm254, %v253, -inf
    %259 = vmax.xlane.f32.xlu0 %v258
    %v260 = vpop.xlane.xlu0 %259
    %v261 = vsub.f32 %v252, %v257
    %v262 = vsub.f32 %v253, %v260
    %v263 = vmul.f32 %v261, 1.442695
    %v264 = vpow.pop %v263
    %v265 = vmul.f32 %v262, 1.442695
    %v266 = vpow.pop %v265
    %v267 = vsel %vm254, %v264, 0.0
    %268 = vadd.xlane.f32.xlu0 %v267
    %v269 = vpop.xlane.xlu0 %268
    %v270 = vsel %vm254, %v266, 0.0
    %271 = vadd.xlane.f32.xlu0 %v270
    %v272 = vpop.xlane.xlu0 %271
    %v273 = vrcp.pop %v269
    %v274 = vrcp.pop %v272
    %v275 = vmul.f32 %v264, %v273
    %v276 = vmul.f32 %v266, %v274
    %277 = vrot.lane.b32.xlu0 %v107, 64
    %v278 = vpop.permute.xlu0 %277
    %279 = vrot.lane.b32.xlu0 %v112, 64
    %v280 = vpop.permute.xlu0 %279
    %v284 = vsel %vm254, %v275, 0
    %v287 = vsel %vm254, %v276, 0
    %289 = vmatprep.subr.mxu0 0.0
    %290 = vmatpush1.msra.mxu0 0.0
    %291 = vmatprep.subr.mxu0 0.0
    %292 = vmatpush1.msra.mxu0 0.0
    %293 = vmatprep.subr.mxu0 0.0
    %294 = vmatpush1.msra.mxu0 0.0
    %295 = vmatprep.subr.mxu0 0.0
    %296 = vmatpush1.msra.mxu0 0.0
    %297 = vmatprep.subr.mxu0 0.0
    %298 = vmatpush1.msra.mxu0 0.0
    %299 = vmatprep.subr.mxu0 0.0
    %300 = vmatpush1.msra.mxu0 0.0
    %301 = vmatprep.subr.mxu0 0.0
    %302 = vmatpush1.msra.mxu0 0.0
    %303 = vmatprep.subr.mxu0 0.0
    %304 = vmatpush1.msra.mxu0 0.0
    %305 = vmatprep.subr.mxu0 0.0
    %306 = vmatpush1.msra.mxu0 0.0
    %307 = vmatprep.subr.mxu0 0.0
    %308 = vmatpush1.msra.mxu0 0.0
    %309 = vmatprep.subr.mxu0 0.0
    %310 = vmatpush1.msra.mxu0 0.0
    %311 = vmatprep.subr.mxu0 0.0
    %312 = vmatpush1.msra.mxu0 0.0
    %313 = vmatprep.subr.mxu0 0.0
    %314 = vmatpush1.msra.mxu0 0.0
    %315 = vmatprep.subr.mxu0 0.0
    %316 = vmatpush1.msra.mxu0 0.0
    %317 = vmatprep.subr.mxu0 0.0
    %318 = vmatpush1.msra.mxu0 %v280
    %319 = vmatprep.subr.mxu0 0.0
    %320 = vmatpush1.msra.mxu0 %v278
    %321 = vmatprep.subr.mxu0 0.0
    %322 = vmatpush2.msra.mxu0 0.0
    %323 = vmatprep.subr.mxu0 0.0
    %324 = vmatpush2.msra.mxu0 0.0
    %325 = vmatprep.subr.mxu0 0.0
    %326 = vmatpush2.msra.mxu0 0.0
    %327 = vmatprep.subr.mxu0 0.0
    %328 = vmatpush2.msra.mxu0 0.0
    %329 = vmatprep.subr.mxu0 0.0
    %330 = vmatpush2.msra.mxu0 0.0
    %331 = vmatprep.subr.mxu0 0.0
    %332 = vmatpush2.msra.mxu0 0.0
    %333 = vmatprep.subr.mxu0 0.0
    %334 = vmatpush2.msra.mxu0 0.0
    %335 = vmatprep.subr.mxu0 0.0
    %336 = vmatpush2.msra.mxu0 0.0
    %337 = vmatprep.subr.mxu0 0.0
    %338 = vmatpush2.msra.mxu0 0.0
    %339 = vmatprep.subr.mxu0 0.0
    %340 = vmatpush2.msra.mxu0 0.0
    %341 = vmatprep.subr.mxu0 0.0
    %342 = vmatpush2.msra.mxu0 0.0
    %343 = vmatprep.subr.mxu0 0.0
    %344 = vmatpush2.msra.mxu0 0.0
    %345 = vmatprep.subr.mxu0 0.0
    %346 = vmatpush2.msra.mxu0 0.0
    %347 = vmatprep.subr.mxu0 0.0
    %348 = vmatpush2.msra.mxu0 0.0
    %349 = vmatprep.subr.mxu0 0.0
    %350 = vmatpush2.msra.mxu0 0.0
    %351 = vmatprep.subr.mxu0 0.0
    %352 = vmatpush2.msra.mxu0 0.0
    %353 = vmatprep.mubr.f32.mxu0 0.0
    %354 = vmatmul.mubr.f32.gmra.mxu0 %v284
    %v355 = vpop.f32.mrf.mxu0
    %v356 = vadd.f32 0.0, %v355
    %v357 = vpop.f32.mrf.mxu0
    %358 = vmatprep.mubr.f32.mxu0 0.0
    %359 = vmatmul.mubr.f32.gmra.mxu0 %v287
    %v360 = vpop.f32.mrf.mxu0
    %v361 = vadd.f32 0.0, %v360
    %v362 = vpop.f32.mrf.mxu0
    %363 = vdwg.mxu0
    %364 = vrot.lane.b32.xlu0 %v107, 120
    %v365 = vpop.permute.xlu0 %364
    %366 = vrot.lane.b32.xlu0 %v112, 120
    %v367 = vpop.permute.xlu0 %366
    %368 = vrot.lane.b32.xlu0 %v107, 88
    %v369 = vpop.permute.xlu0 %368
    %370 = vrot.lane.b32.xlu0 %v112, 88
    %v371 = vpop.permute.xlu0 %370
    %v372 = vsel %vm166, %v365, 0
    %v374 = vsel %vm166, %v367, 0
    %v376 = vsel %vm166, %v369, 0
    %v378 = vsel %vm166, %v371, 0
    %380 = vmatprep.subr.mxu0 0.0
    %381 = vmatpush1.xpose.msra.mxu0 0.0
    %382 = vmatprep.subr.mxu0 0.0
    %383 = vmatpush1.xpose.msra.mxu0 0.0
    %384 = vmatprep.subr.mxu0 0.0
    %385 = vmatpush1.xpose.msra.mxu0 0.0
    %386 = vmatprep.subr.mxu0 0.0
    %387 = vmatpush1.xpose.msra.mxu0 0.0
    %388 = vmatprep.subr.mxu0 0.0
    %389 = vmatpush1.xpose.msra.mxu0 0.0
    %390 = vmatprep.subr.mxu0 0.0
    %391 = vmatpush1.xpose.msra.mxu0 0.0
    %392 = vmatprep.subr.mxu0 0.0
    %393 = vmatpush1.xpose.msra.mxu0 0.0
    %394 = vmatprep.subr.mxu0 0.0
    %395 = vmatpush1.xpose.msra.mxu0 0.0
    %396 = vmatprep.subr.mxu0 0.0
    %397 = vmatpush1.xpose.msra.mxu0 0.0
    %398 = vmatprep.subr.mxu0 0.0
    %399 = vmatpush1.xpose.msra.mxu0 0.0
    %400 = vmatprep.subr.mxu0 0.0
    %401 = vmatpush1.xpose.msra.mxu0 0.0
    %402 = vmatprep.subr.mxu0 0.0
    %403 = vmatpush1.xpose.msra.mxu0 0.0
    %404 = vmatprep.subr.mxu0 0.0
    %405 = vmatpush1.xpose.msra.mxu0 0.0
    %406 = vmatprep.subr.mxu0 0.0
    %407 = vmatpush1.xpose.msra.mxu0 0.0
    %408 = vmatprep.subr.mxu0 0.0
    %409 = vmatpush1.xpose.msra.mxu0 %v378
    %410 = vmatprep.subr.mxu0 0.0
    %411 = vmatpush1.xpose.msra.mxu0 %v376
    %412 = vmatprep.subr.mxu0 0.0
    %413 = vmatpush2.xpose.msra.mxu0 0.0
    %414 = vmatprep.subr.mxu0 0.0
    %415 = vmatpush2.xpose.msra.mxu0 0.0
    %416 = vmatprep.subr.mxu0 0.0
    %417 = vmatpush2.xpose.msra.mxu0 0.0
    %418 = vmatprep.subr.mxu0 0.0
    %419 = vmatpush2.xpose.msra.mxu0 0.0
    %420 = vmatprep.subr.mxu0 0.0
    %421 = vmatpush2.xpose.msra.mxu0 0.0
    %422 = vmatprep.subr.mxu0 0.0
    %423 = vmatpush2.xpose.msra.mxu0 0.0
    %424 = vmatprep.subr.mxu0 0.0
    %425 = vmatpush2.xpose.msra.mxu0 0.0
    %426 = vmatprep.subr.mxu0 0.0
    %427 = vmatpush2.xpose.msra.mxu0 0.0
    %428 = vmatprep.subr.mxu0 0.0
    %429 = vmatpush2.xpose.msra.mxu0 0.0
    %430 = vmatprep.subr.mxu0 0.0
    %431 = vmatpush2.xpose.msra.mxu0 0.0
    %432 = vmatprep.subr.mxu0 0.0
    %433 = vmatpush2.xpose.msra.mxu0 0.0
    %434 = vmatprep.subr.mxu0 0.0
    %435 = vmatpush2.xpose.msra.mxu0 0.0
    %436 = vmatprep.subr.mxu0 0.0
    %437 = vmatpush2.xpose.msra.mxu0 0.0
    %438 = vmatprep.subr.mxu0 0.0
    %439 = vmatpush2.xpose.msra.mxu0 0.0
    %440 = vmatprep.subr.mxu0 0.0
    %441 = vmatpush2.xpose.msra.mxu0 0.0
    %442 = vmatprep.subr.mxu0 0.0
    %443 = vmatpush2.xpose.msra.mxu0 0.0
    %444 = vmatprep.mubr.f32.mxu0 0.0
    %445 = vmatmul.mubr.f32.gmra.mxu0 %v372
    %v446 = vpop.f32.mrf.mxu0
    %v447 = vadd.f32 0.0, %v446
    %v448 = vpop.f32.mrf.mxu0
    %449 = vmatprep.mubr.f32.mxu0 0.0
    %450 = vmatmul.mubr.f32.gmra.mxu0 %v374
    %v451 = vpop.f32.mrf.mxu0
    %v452 = vadd.f32 0.0, %v451
    %v453 = vpop.f32.mrf.mxu0
    %454 = vdwg.mxu0
    %v455 = vmul.f32 %v447, 0.35355338
    %v456 = vmul.f32 %v452, 0.35355338
    %v457 = vadd.f32 %v455, %v158
    %v458 = vadd.f32 %v456, %v159
    %v459 = vsel %vm254, %v457, -inf
    %460 = vmax.xlane.f32.xlu0 %v459
    %v461 = vpop.xlane.xlu0 %460
    %v462 = vsel %vm254, %v458, -inf
    %463 = vmax.xlane.f32.xlu0 %v462
    %v464 = vpop.xlane.xlu0 %463
    %v465 = vsub.f32 %v457, %v461
    %v466 = vsub.f32 %v458, %v464
    %v467 = vmul.f32 %v465, 1.442695
    %v468 = vpow.pop %v467
    %v469 = vmul.f32 %v466, 1.442695
    %v470 = vpow.pop %v469
    %v471 = vsel %vm254, %v468, 0.0
    %472 = vadd.xlane.f32.xlu0 %v471
    %v473 = vpop.xlane.xlu0 %472
    %v474 = vsel %vm254, %v470, 0.0
    %475 = vadd.xlane.f32.xlu0 %v474
    %v476 = vpop.xlane.xlu0 %475
    %v477 = vrcp.pop %v473
    %v478 = vrcp.pop %v476
    %v479 = vmul.f32 %v468, %v477
    %v480 = vmul.f32 %v470, %v478
    %481 = vrot.lane.b32.xlu0 %v107, 56
    %v482 = vpop.permute.xlu0 %481
    %483 = vrot.lane.b32.xlu0 %v112, 56
    %v484 = vpop.permute.xlu0 %483
    %v488 = vsel %vm254, %v479, 0
    %v491 = vsel %vm254, %v480, 0
    %493 = vmatprep.subr.mxu0 0.0
    %494 = vmatpush1.msra.mxu0 0.0
    %495 = vmatprep.subr.mxu0 0.0
    %496 = vmatpush1.msra.mxu0 0.0
    %497 = vmatprep.subr.mxu0 0.0
    %498 = vmatpush1.msra.mxu0 0.0
    %499 = vmatprep.subr.mxu0 0.0
    %500 = vmatpush1.msra.mxu0 0.0
    %501 = vmatprep.subr.mxu0 0.0
    %502 = vmatpush1.msra.mxu0 0.0
    %503 = vmatprep.subr.mxu0 0.0
    %504 = vmatpush1.msra.mxu0 0.0
    %505 = vmatprep.subr.mxu0 0.0
    %506 = vmatpush1.msra.mxu0 0.0
    %507 = vmatprep.subr.mxu0 0.0
    %508 = vmatpush1.msra.mxu0 0.0
    %509 = vmatprep.subr.mxu0 0.0
    %510 = vmatpush1.msra.mxu0 0.0
    %511 = vmatprep.subr.mxu0 0.0
    %512 = vmatpush1.msra.mxu0 0.0
    %513 = vmatprep.subr.mxu0 0.0
    %514 = vmatpush1.msra.mxu0 0.0
    %515 = vmatprep.subr.mxu0 0.0
    %516 = vmatpush1.msra.mxu0 0.0
    %517 = vmatprep.subr.mxu0 0.0
    %518 = vmatpush1.msra.mxu0 0.0
    %519 = vmatprep.subr.mxu0 0.0
    %520 = vmatpush1.msra.mxu0 0.0
    %521 = vmatprep.subr.mxu0 0.0
    %522 = vmatpush1.msra.mxu0 %v484
    %523 = vmatprep.subr.mxu0 0.0
    %524 = vmatpush1.msra.mxu0 %v482
    %525 = vmatprep.subr.mxu0 0.0
    %526 = vmatpush2.msra.mxu0 0.0
    %527 = vmatprep.subr.mxu0 0.0
    %528 = vmatpush2.msra.mxu0 0.0
    %529 = vmatprep.subr.mxu0 0.0
    %530 = vmatpush2.msra.mxu0 0.0
    %531 = vmatprep.subr.mxu0 0.0
    %532 = vmatpush2.msra.mxu0 0.0
    %533 = vmatprep.subr.mxu0 0.0
    %534 = vmatpush2.msra.mxu0 0.0
    %535 = vmatprep.subr.mxu0 0.0
    %536 = vmatpush2.msra.mxu0 0.0
    %537 = vmatprep.subr.mxu0 0.0
    %538 = vmatpush2.msra.mxu0 0.0
    %539 = vmatprep.subr.mxu0 0.0
    %540 = vmatpush2.msra.mxu0 0.0
    %541 = vmatprep.subr.mxu0 0.0
    %542 = vmatpush2.msra.mxu0 0.0
    %543 = vmatprep.subr.mxu0 0.0
    %544 = vmatpush2.msra.mxu0 0.0
    %545 = vmatprep.subr.mxu0 0.0
    %546 = vmatpush2.msra.mxu0 0.0
    %547 = vmatprep.subr.mxu0 0.0
    %548 = vmatpush2.msra.mxu0 0.0
    %549 = vmatprep.subr.mxu0 0.0
    %550 = vmatpush2.msra.mxu0 0.0
    %551 = vmatprep.subr.mxu0 0.0
    %552 = vmatpush2.msra.mxu0 0.0
    %553 = vmatprep.subr.mxu0 0.0
    %554 = vmatpush2.msra.mxu0 0.0
    %555 = vmatprep.subr.mxu0 0.0
    %556 = vmatpush2.msra.mxu0 0.0
    %557 = vmatprep.mubr.f32.mxu0 0.0
    %558 = vmatmul.mubr.f32.gmra.mxu0 %v488
    %v559 = vpop.f32.mrf.mxu0
    %v560 = vadd.f32 0.0, %v559
    %v561 = vpop.f32.mrf.mxu0
    %562 = vmatprep.mubr.f32.mxu0 0.0
    %563 = vmatmul.mubr.f32.gmra.mxu0 %v491
    %v564 = vpop.f32.mrf.mxu0
    %v565 = vadd.f32 0.0, %v564
    %v566 = vpop.f32.mrf.mxu0
    %567 = vdwg.mxu0
    %568 = vrot.lane.b32.xlu0 %v107, 112
    %v569 = vpop.permute.xlu0 %568
    %570 = vrot.lane.b32.xlu0 %v112, 112
    %v571 = vpop.permute.xlu0 %570
    %572 = vrot.lane.b32.xlu0 %v107, 80
    %v573 = vpop.permute.xlu0 %572
    %574 = vrot.lane.b32.xlu0 %v112, 80
    %v575 = vpop.permute.xlu0 %574
    %v576 = vsel %vm166, %v569, 0
    %v578 = vsel %vm166, %v571, 0
    %v580 = vsel %vm166, %v573, 0
    %v582 = vsel %vm166, %v575, 0
    %584 = vmatprep.subr.mxu0 0.0
    %585 = vmatpush1.xpose.msra.mxu0 0.0
    %586 = vmatprep.subr.mxu0 0.0
    %587 = vmatpush1.xpose.msra.mxu0 0.0
    %588 = vmatprep.subr.mxu0 0.0
    %589 = vmatpush1.xpose.msra.mxu0 0.0
    %590 = vmatprep.subr.mxu0 0.0
    %591 = vmatpush1.xpose.msra.mxu0 0.0
    %592 = vmatprep.subr.mxu0 0.0
    %593 = vmatpush1.xpose.msra.mxu0 0.0
    %594 = vmatprep.subr.mxu0 0.0
    %595 = vmatpush1.xpose.msra.mxu0 0.0
    %596 = vmatprep.subr.mxu0 0.0
    %597 = vmatpush1.xpose.msra.mxu0 0.0
    %598 = vmatprep.subr.mxu0 0.0
    %599 = vmatpush1.xpose.msra.mxu0 0.0
    %600 = vmatprep.subr.mxu0 0.0
    %601 = vmatpush1.xpose.msra.mxu0 0.0
    %602 = vmatprep.subr.mxu0 0.0
    %603 = vmatpush1.xpose.msra.mxu0 0.0
    %604 = vmatprep.subr.mxu0 0.0
    %605 = vmatpush1.xpose.msra.mxu0 0.0
    %606 = vmatprep.subr.mxu0 0.0
    %607 = vmatpush1.xpose.msra.mxu0 0.0
    %608 = vmatprep.subr.mxu0 0.0
    %609 = vmatpush1.xpose.msra.mxu0 0.0
    %610 = vmatprep.subr.mxu0 0.0
    %611 = vmatpush1.xpose.msra.mxu0 0.0
    %612 = vmatprep.subr.mxu0 0.0
    %613 = vmatpush1.xpose.msra.mxu0 %v582
    %614 = vmatprep.subr.mxu0 0.0
    %615 = vmatpush1.xpose.msra.mxu0 %v580
    %616 = vmatprep.subr.mxu0 0.0
    %617 = vmatpush2.xpose.msra.mxu0 0.0
    %618 = vmatprep.subr.mxu0 0.0
    %619 = vmatpush2.xpose.msra.mxu0 0.0
    %620 = vmatprep.subr.mxu0 0.0
    %621 = vmatpush2.xpose.msra.mxu0 0.0
    %622 = vmatprep.subr.mxu0 0.0
    %623 = vmatpush2.xpose.msra.mxu0 0.0
    %624 = vmatprep.subr.mxu0 0.0
    %625 = vmatpush2.xpose.msra.mxu0 0.0
    %626 = vmatprep.subr.mxu0 0.0
    %627 = vmatpush2.xpose.msra.mxu0 0.0
    %628 = vmatprep.subr.mxu0 0.0
    %629 = vmatpush2.xpose.msra.mxu0 0.0
    %630 = vmatprep.subr.mxu0 0.0
    %631 = vmatpush2.xpose.msra.mxu0 0.0
    %632 = vmatprep.subr.mxu0 0.0
    %633 = vmatpush2.xpose.msra.mxu0 0.0
    %634 = vmatprep.subr.mxu0 0.0
    %635 = vmatpush2.xpose.msra.mxu0 0.0
    %636 = vmatprep.subr.mxu0 0.0
    %637 = vmatpush2.xpose.msra.mxu0 0.0
    %638 = vmatprep.subr.mxu0 0.0
    %639 = vmatpush2.xpose.msra.mxu0 0.0
    %640 = vmatprep.subr.mxu0 0.0
    %641 = vmatpush2.xpose.msra.mxu0 0.0
    %642 = vmatprep.subr.mxu0 0.0
    %643 = vmatpush2.xpose.msra.mxu0 0.0
    %644 = vmatprep.subr.mxu0 0.0
    %645 = vmatpush2.xpose.msra.mxu0 0.0
    %646 = vmatprep.subr.mxu0 0.0
    %647 = vmatpush2.xpose.msra.mxu0 0.0
    %648 = vmatprep.mubr.f32.mxu0 0.0
    %649 = vmatmul.mubr.f32.gmra.mxu0 %v576
    %v650 = vpop.f32.mrf.mxu0
    %v651 = vadd.f32 0.0, %v650
    %v652 = vpop.f32.mrf.mxu0
    %653 = vmatprep.mubr.f32.mxu0 0.0
    %654 = vmatmul.mubr.f32.gmra.mxu0 %v578
    %v655 = vpop.f32.mrf.mxu0
    %v656 = vadd.f32 0.0, %v655
    %v657 = vpop.f32.mrf.mxu0
    %658 = vdwg.mxu0
    %v659 = vmul.f32 %v651, 0.35355338
    %v660 = vmul.f32 %v656, 0.35355338
    %v661 = vadd.f32 %v659, %v158
    %v662 = vadd.f32 %v660, %v159
    %v663 = vsel %vm254, %v661, -inf
    %664 = vmax.xlane.f32.xlu0 %v663
    %v665 = vpop.xlane.xlu0 %664
    %v666 = vsel %vm254, %v662, -inf
    %667 = vmax.xlane.f32.xlu0 %v666
    %v668 = vpop.xlane.xlu0 %667
    %v669 = vsub.f32 %v661, %v665
    %v670 = vsub.f32 %v662, %v668
    %v671 = vmul.f32 %v669, 1.442695
    %v672 = vpow.pop %v671
    %v673 = vmul.f32 %v670, 1.442695
    %v674 = vpow.pop %v673
    %v675 = vsel %vm254, %v672, 0.0
    %676 = vadd.xlane.f32.xlu0 %v675
    %v677 = vpop.xlane.xlu0 %676
    %v678 = vsel %vm254, %v674, 0.0
    %679 = vadd.xlane.f32.xlu0 %v678
    %v680 = vpop.xlane.xlu0 %679
    %v681 = vrcp.pop %v677
    %v682 = vrcp.pop %v680
    %v683 = vmul.f32 %v672, %v681
    %v684 = vmul.f32 %v674, %v682
    %685 = vrot.lane.b32.xlu0 %v107, 48
    %v686 = vpop.permute.xlu0 %685
    %687 = vrot.lane.b32.xlu0 %v112, 48
    %v688 = vpop.permute.xlu0 %687
    %v692 = vsel %vm254, %v683, 0
    %v695 = vsel %vm254, %v684, 0
    %697 = vmatprep.subr.mxu0 0.0
    %698 = vmatpush1.msra.mxu0 0.0
    %699 = vmatprep.subr.mxu0 0.0
    %700 = vmatpush1.msra.mxu0 0.0
    %701 = vmatprep.subr.mxu0 0.0
    %702 = vmatpush1.msra.mxu0 0.0
    %703 = vmatprep.subr.mxu0 0.0
    %704 = vmatpush1.msra.mxu0 0.0
    %705 = vmatprep.subr.mxu0 0.0
    %706 = vmatpush1.msra.mxu0 0.0
    %707 = vmatprep.subr.mxu0 0.0
    %708 = vmatpush1.msra.mxu0 0.0
    %709 = vmatprep.subr.mxu0 0.0
    %710 = vmatpush1.msra.mxu0 0.0
    %711 = vmatprep.subr.mxu0 0.0
    %712 = vmatpush1.msra.mxu0 0.0
    %713 = vmatprep.subr.mxu0 0.0
    %714 = vmatpush1.msra.mxu0 0.0
    %715 = vmatprep.subr.mxu0 0.0
    %716 = vmatpush1.msra.mxu0 0.0
    %717 = vmatprep.subr.mxu0 0.0
    %718 = vmatpush1.msra.mxu0 0.0
    %719 = vmatprep.subr.mxu0 0.0
    %720 = vmatpush1.msra.mxu0 0.0
    %721 = vmatprep.subr.mxu0 0.0
    %722 = vmatpush1.msra.mxu0 0.0
    %723 = vmatprep.subr.mxu0 0.0
    %724 = vmatpush1.msra.mxu0 0.0
    %725 = vmatprep.subr.mxu0 0.0
    %726 = vmatpush1.msra.mxu0 %v688
    %727 = vmatprep.subr.mxu0 0.0
    %728 = vmatpush1.msra.mxu0 %v686
    %729 = vmatprep.subr.mxu0 0.0
    %730 = vmatpush2.msra.mxu0 0.0
    %731 = vmatprep.subr.mxu0 0.0
    %732 = vmatpush2.msra.mxu0 0.0
    %733 = vmatprep.subr.mxu0 0.0
    %734 = vmatpush2.msra.mxu0 0.0
    %735 = vmatprep.subr.mxu0 0.0
    %736 = vmatpush2.msra.mxu0 0.0
    %737 = vmatprep.subr.mxu0 0.0
    %738 = vmatpush2.msra.mxu0 0.0
    %739 = vmatprep.subr.mxu0 0.0
    %740 = vmatpush2.msra.mxu0 0.0
    %741 = vmatprep.subr.mxu0 0.0
    %742 = vmatpush2.msra.mxu0 0.0
    %743 = vmatprep.subr.mxu0 0.0
    %744 = vmatpush2.msra.mxu0 0.0
    %745 = vmatprep.subr.mxu0 0.0
    %746 = vmatpush2.msra.mxu0 0.0
    %747 = vmatprep.subr.mxu0 0.0
    %748 = vmatpush2.msra.mxu0 0.0
    %749 = vmatprep.subr.mxu0 0.0
    %750 = vmatpush2.msra.mxu0 0.0
    %751 = vmatprep.subr.mxu0 0.0
    %752 = vmatpush2.msra.mxu0 0.0
    %753 = vmatprep.subr.mxu0 0.0
    %754 = vmatpush2.msra.mxu0 0.0
    %755 = vmatprep.subr.mxu0 0.0
    %756 = vmatpush2.msra.mxu0 0.0
    %757 = vmatprep.subr.mxu0 0.0
    %758 = vmatpush2.msra.mxu0 0.0
    %759 = vmatprep.subr.mxu0 0.0
    %760 = vmatpush2.msra.mxu0 0.0
    %761 = vmatprep.mubr.f32.mxu0 0.0
    %762 = vmatmul.mubr.f32.gmra.mxu0 %v692
    %v763 = vpop.f32.mrf.mxu0
    %v764 = vadd.f32 0.0, %v763
    %v765 = vpop.f32.mrf.mxu0
    %766 = vmatprep.mubr.f32.mxu0 0.0
    %767 = vmatmul.mubr.f32.gmra.mxu0 %v695
    %v768 = vpop.f32.mrf.mxu0
    %v769 = vadd.f32 0.0, %v768
    %v770 = vpop.f32.mrf.mxu0
    %771 = vdwg.mxu0
    %772 = vrot.lane.b32.xlu0 %v107, 104
    %v773 = vpop.permute.xlu0 %772
    %774 = vrot.lane.b32.xlu0 %v112, 104
    %v775 = vpop.permute.xlu0 %774
    %776 = vrot.lane.b32.xlu0 %v107, 72
    %v777 = vpop.permute.xlu0 %776
    %778 = vrot.lane.b32.xlu0 %v112, 72
    %v779 = vpop.permute.xlu0 %778
    %v780 = vsel %vm166, %v773, 0
    %v782 = vsel %vm166, %v775, 0
    %v784 = vsel %vm166, %v777, 0
    %v786 = vsel %vm166, %v779, 0
    %788 = vmatprep.subr.mxu0 0.0
    %789 = vmatpush1.xpose.msra.mxu0 0.0
    %790 = vmatprep.subr.mxu0 0.0
    %791 = vmatpush1.xpose.msra.mxu0 0.0
    %792 = vmatprep.subr.mxu0 0.0
    %793 = vmatpush1.xpose.msra.mxu0 0.0
    %794 = vmatprep.subr.mxu0 0.0
    %795 = vmatpush1.xpose.msra.mxu0 0.0
    %796 = vmatprep.subr.mxu0 0.0
    %797 = vmatpush1.xpose.msra.mxu0 0.0
    %798 = vmatprep.subr.mxu0 0.0
    %799 = vmatpush1.xpose.msra.mxu0 0.0
    %800 = vmatprep.subr.mxu0 0.0
    %801 = vmatpush1.xpose.msra.mxu0 0.0
    %802 = vmatprep.subr.mxu0 0.0
    %803 = vmatpush1.xpose.msra.mxu0 0.0
    %804 = vmatprep.subr.mxu0 0.0
    %805 = vmatpush1.xpose.msra.mxu0 0.0
    %806 = vmatprep.subr.mxu0 0.0
    %807 = vmatpush1.xpose.msra.mxu0 0.0
    %808 = vmatprep.subr.mxu0 0.0
    %809 = vmatpush1.xpose.msra.mxu0 0.0
    %810 = vmatprep.subr.mxu0 0.0
    %811 = vmatpush1.xpose.msra.mxu0 0.0
    %812 = vmatprep.subr.mxu0 0.0
    %813 = vmatpush1.xpose.msra.mxu0 0.0
    %814 = vmatprep.subr.mxu0 0.0
    %815 = vmatpush1.xpose.msra.mxu0 0.0
    %816 = vmatprep.subr.mxu0 0.0
    %817 = vmatpush1.xpose.msra.mxu0 %v786
    %818 = vmatprep.subr.mxu0 0.0
    %819 = vmatpush1.xpose.msra.mxu0 %v784
    %820 = vmatprep.subr.mxu0 0.0
    %821 = vmatpush2.xpose.msra.mxu0 0.0
    %822 = vmatprep.subr.mxu0 0.0
    %823 = vmatpush2.xpose.msra.mxu0 0.0
    %824 = vmatprep.subr.mxu0 0.0
    %825 = vmatpush2.xpose.msra.mxu0 0.0
    %826 = vmatprep.subr.mxu0 0.0
    %827 = vmatpush2.xpose.msra.mxu0 0.0
    %828 = vmatprep.subr.mxu0 0.0
    %829 = vmatpush2.xpose.msra.mxu0 0.0
    %830 = vmatprep.subr.mxu0 0.0
    %831 = vmatpush2.xpose.msra.mxu0 0.0
    %832 = vmatprep.subr.mxu0 0.0
    %833 = vmatpush2.xpose.msra.mxu0 0.0
    %834 = vmatprep.subr.mxu0 0.0
    %835 = vmatpush2.xpose.msra.mxu0 0.0
    %836 = vmatprep.subr.mxu0 0.0
    %837 = vmatpush2.xpose.msra.mxu0 0.0
    %838 = vmatprep.subr.mxu0 0.0
    %839 = vmatpush2.xpose.msra.mxu0 0.0
    %840 = vmatprep.subr.mxu0 0.0
    %841 = vmatpush2.xpose.msra.mxu0 0.0
    %842 = vmatprep.subr.mxu0 0.0
    %843 = vmatpush2.xpose.msra.mxu0 0.0
    %844 = vmatprep.subr.mxu0 0.0
    %845 = vmatpush2.xpose.msra.mxu0 0.0
    %846 = vmatprep.subr.mxu0 0.0
    %847 = vmatpush2.xpose.msra.mxu0 0.0
    %848 = vmatprep.subr.mxu0 0.0
    %849 = vmatpush2.xpose.msra.mxu0 0.0
    %850 = vmatprep.subr.mxu0 0.0
    %851 = vmatpush2.xpose.msra.mxu0 0.0
    %852 = vmatprep.mubr.f32.mxu0 0.0
    %853 = vmatmul.mubr.f32.gmra.mxu0 %v780
    %v854 = vpop.f32.mrf.mxu0
    %v855 = vadd.f32 0.0, %v854
    %v856 = vpop.f32.mrf.mxu0
    %857 = vmatprep.mubr.f32.mxu0 0.0
    %858 = vmatmul.mubr.f32.gmra.mxu0 %v782
    %v859 = vpop.f32.mrf.mxu0
    %v860 = vadd.f32 0.0, %v859
    %v861 = vpop.f32.mrf.mxu0
    %862 = vdwg.mxu0
    %v863 = vmul.f32 %v855, 0.35355338
    %v864 = vmul.f32 %v860, 0.35355338
    %v865 = vadd.f32 %v863, %v158
    %v866 = vadd.f32 %v864, %v159
    %v867 = vsel %vm254, %v865, -inf
    %868 = vmax.xlane.f32.xlu0 %v867
    %v869 = vpop.xlane.xlu0 %868
    %v870 = vsel %vm254, %v866, -inf
    %871 = vmax.xlane.f32.xlu0 %v870
    %v872 = vpop.xlane.xlu0 %871
    %v873 = vsub.f32 %v865, %v869
    %v874 = vsub.f32 %v866, %v872
    %v875 = vmul.f32 %v873, 1.442695
    %v876 = vpow.pop %v875
    %v877 = vmul.f32 %v874, 1.442695
    %v878 = vpow.pop %v877
    %v879 = vsel %vm254, %v876, 0.0
    %880 = vadd.xlane.f32.xlu0 %v879
    %v881 = vpop.xlane.xlu0 %880
    %v882 = vsel %vm254, %v878, 0.0
    %883 = vadd.xlane.f32.xlu0 %v882
    %v884 = vpop.xlane.xlu0 %883
    %v885 = vrcp.pop %v881
    %v886 = vrcp.pop %v884
    %v887 = vmul.f32 %v876, %v885
    %v888 = vmul.f32 %v878, %v886
    %889 = vrot.lane.b32.xlu0 %v107, 40
    %v890 = vpop.permute.xlu0 %889
    %891 = vrot.lane.b32.xlu0 %v112, 40
    %v892 = vpop.permute.xlu0 %891
    %v896 = vsel %vm254, %v887, 0
    %v899 = vsel %vm254, %v888, 0
    %901 = vmatprep.subr.mxu0 0.0
    %902 = vmatpush1.msra.mxu0 0.0
    %903 = vmatprep.subr.mxu0 0.0
    %904 = vmatpush1.msra.mxu0 0.0
    %905 = vmatprep.subr.mxu0 0.0
    %906 = vmatpush1.msra.mxu0 0.0
    %907 = vmatprep.subr.mxu0 0.0
    %908 = vmatpush1.msra.mxu0 0.0
    %909 = vmatprep.subr.mxu0 0.0
    %910 = vmatpush1.msra.mxu0 0.0
    %911 = vmatprep.subr.mxu0 0.0
    %912 = vmatpush1.msra.mxu0 0.0
    %913 = vmatprep.subr.mxu0 0.0
    %914 = vmatpush1.msra.mxu0 0.0
    %915 = vmatprep.subr.mxu0 0.0
    %916 = vmatpush1.msra.mxu0 0.0
    %917 = vmatprep.subr.mxu0 0.0
    %918 = vmatpush1.msra.mxu0 0.0
    %919 = vmatprep.subr.mxu0 0.0
    %920 = vmatpush1.msra.mxu0 0.0
    %921 = vmatprep.subr.mxu0 0.0
    %922 = vmatpush1.msra.mxu0 0.0
    %923 = vmatprep.subr.mxu0 0.0
    %924 = vmatpush1.msra.mxu0 0.0
    %925 = vmatprep.subr.mxu0 0.0
    %926 = vmatpush1.msra.mxu0 0.0
    %927 = vmatprep.subr.mxu0 0.0
    %928 = vmatpush1.msra.mxu0 0.0
    %929 = vmatprep.subr.mxu0 0.0
    %930 = vmatpush1.msra.mxu0 %v892
    %931 = vmatprep.subr.mxu0 0.0
    %932 = vmatpush1.msra.mxu0 %v890
    %933 = vmatprep.subr.mxu0 0.0
    %934 = vmatpush2.msra.mxu0 0.0
    %935 = vmatprep.subr.mxu0 0.0
    %936 = vmatpush2.msra.mxu0 0.0
    %937 = vmatprep.subr.mxu0 0.0
    %938 = vmatpush2.msra.mxu0 0.0
    %939 = vmatprep.subr.mxu0 0.0
    %940 = vmatpush2.msra.mxu0 0.0
    %941 = vmatprep.subr.mxu0 0.0
    %942 = vmatpush2.msra.mxu0 0.0
    %943 = vmatprep.subr.mxu0 0.0
    %944 = vmatpush2.msra.mxu0 0.0
    %945 = vmatprep.subr.mxu0 0.0
    %946 = vmatpush2.msra.mxu0 0.0
    %947 = vmatprep.subr.mxu0 0.0
    %948 = vmatpush2.msra.mxu0 0.0
    %949 = vmatprep.subr.mxu0 0.0
    %950 = vmatpush2.msra.mxu0 0.0
    %951 = vmatprep.subr.mxu0 0.0
    %952 = vmatpush2.msra.mxu0 0.0
    %953 = vmatprep.subr.mxu0 0.0
    %954 = vmatpush2.msra.mxu0 0.0
    %955 = vmatprep.subr.mxu0 0.0
    %956 = vmatpush2.msra.mxu0 0.0
    %957 = vmatprep.subr.mxu0 0.0
    %958 = vmatpush2.msra.mxu0 0.0
    %959 = vmatprep.subr.mxu0 0.0
    %960 = vmatpush2.msra.mxu0 0.0
    %961 = vmatprep.subr.mxu0 0.0
    %962 = vmatpush2.msra.mxu0 0.0
    %963 = vmatprep.subr.mxu0 0.0
    %964 = vmatpush2.msra.mxu0 0.0
    %965 = vmatprep.mubr.f32.mxu0 0.0
    %966 = vmatmul.mubr.f32.gmra.mxu0 %v896
    %v967 = vpop.f32.mrf.mxu0
    %v968 = vadd.f32 0.0, %v967
    %v969 = vpop.f32.mrf.mxu0
    %970 = vmatprep.mubr.f32.mxu0 0.0
    %971 = vmatmul.mubr.f32.gmra.mxu0 %v899
    %v972 = vpop.f32.mrf.mxu0
    %v973 = vadd.f32 0.0, %v972
    %v974 = vpop.f32.mrf.mxu0
    %975 = vdwg.mxu0
    %978 = vrot.lane.b32.xlu0 %v560, 8
    %v979 = vpop.permute.xlu0 %978
    %980 = vrot.lane.b32.xlu0 %v565, 8
    %v981 = vpop.permute.xlu0 %980
    %986 = vrot.lane.b32.xlu0 %v764, 16
    %v987 = vpop.permute.xlu0 %986
    %988 = vrot.lane.b32.xlu0 %v769, 16
    %v989 = vpop.permute.xlu0 %988
    %994 = vrot.lane.b32.xlu0 %v968, 24
    %v995 = vpop.permute.xlu0 %994
    %996 = vrot.lane.b32.xlu0 %v973, 24
    %v997 = vpop.permute.xlu0 %996
    %v1000 = vsel %vm166, %v356, %v979
    %v1001 = vsel %vm166, %v361, %v981
    %v1002 = vsel %vm254, %v1000, %v987
    %v1003 = vsel %vm254, %v1001, %v989
    %vm1004 = vcmask 195584
    %v1005 = vsel %vm1004, %v1002, %v995
    %v1006 = vsel %vm1004, %v1003, %v997
    %v1007 = vlaneseq
    %v1008 = vshrl.u32 %v1007, 7
    %v1009 = vsub.s32 1, %v1008
    %v1010 = vrot.slane %v28, %v1009
    %1015 = vrot.lane.b32.xlu0 %v20, 32
    %v1016 = vpop.permute.xlu0 %1015
    %1017 = vrot.lane.b32.xlu0 %v22, 32
    %v1018 = vpop.permute.xlu0 %1017
    %1019 = vrot.lane.b32.xlu0 %v24, 32
    %v1020 = vpop.permute.xlu0 %1019
    %1021 = vrot.lane.b32.xlu0 %v26, 32
    %v1022 = vpop.permute.xlu0 %1021
    %v1028 = vsel %vm33, %v1005, 0
    %v1031 = vsel %vm33, %v1006, 0
    %1033 = vmatprep.subr.mxu0 0.0
    %1034 = vmatpush1.msra.mxu0 0.0
    %1035 = vmatprep.subr.mxu0 0.0
    %1036 = vmatpush1.msra.mxu0 0.0
    %1037 = vmatprep.subr.mxu0 0.0
    %1038 = vmatpush1.msra.mxu0 0.0
    %1039 = vmatprep.subr.mxu0 0.0
    %1040 = vmatpush1.msra.mxu0 0.0
    %1041 = vmatprep.subr.mxu0 0.0
    %1042 = vmatpush1.msra.mxu0 0.0
    %1043 = vmatprep.subr.mxu0 0.0
    %1044 = vmatpush1.msra.mxu0 0.0
    %1045 = vmatprep.subr.mxu0 0.0
    %1046 = vmatpush1.msra.mxu0 0.0
    %1047 = vmatprep.subr.mxu0 0.0
    %1048 = vmatpush1.msra.mxu0 0.0
    %1049 = vmatprep.subr.mxu0 0.0
    %1050 = vmatpush1.msra.mxu0 0.0
    %1051 = vmatprep.subr.mxu0 0.0
    %1052 = vmatpush1.msra.mxu0 0.0
    %1053 = vmatprep.subr.mxu0 0.0
    %1054 = vmatpush1.msra.mxu0 0.0
    %1055 = vmatprep.subr.mxu0 0.0
    %1056 = vmatpush1.msra.mxu0 0.0
    %1057 = vmatprep.subr.mxu0 0.0
    %1058 = vmatpush1.msra.mxu0 %v1022
    %1059 = vmatprep.subr.mxu0 0.0
    %1060 = vmatpush1.msra.mxu0 %v1020
    %1061 = vmatprep.subr.mxu0 0.0
    %1062 = vmatpush1.msra.mxu0 %v1018
    %1063 = vmatprep.subr.mxu0 0.0
    %1064 = vmatpush1.msra.mxu0 %v1016
    %1065 = vmatprep.subr.mxu0 0.0
    %1066 = vmatpush2.msra.mxu0 0.0
    %1067 = vmatprep.subr.mxu0 0.0
    %1068 = vmatpush2.msra.mxu0 0.0
    %1069 = vmatprep.subr.mxu0 0.0
    %1070 = vmatpush2.msra.mxu0 0.0
    %1071 = vmatprep.subr.mxu0 0.0
    %1072 = vmatpush2.msra.mxu0 0.0
    %1073 = vmatprep.subr.mxu0 0.0
    %1074 = vmatpush2.msra.mxu0 0.0
    %1075 = vmatprep.subr.mxu0 0.0
    %1076 = vmatpush2.msra.mxu0 0.0
    %1077 = vmatprep.subr.mxu0 0.0
    %1078 = vmatpush2.msra.mxu0 0.0
    %1079 = vmatprep.subr.mxu0 0.0
    %1080 = vmatpush2.msra.mxu0 0.0
    %1081 = vmatprep.subr.mxu0 0.0
    %1082 = vmatpush2.msra.mxu0 0.0
    %1083 = vmatprep.subr.mxu0 0.0
    %1084 = vmatpush2.msra.mxu0 0.0
    %1085 = vmatprep.subr.mxu0 0.0
    %1086 = vmatpush2.msra.mxu0 0.0
    %1087 = vmatprep.subr.mxu0 0.0
    %1088 = vmatpush2.msra.mxu0 0.0
    %1089 = vmatprep.subr.mxu0 0.0
    %1090 = vmatpush2.msra.mxu0 0.0
    %1091 = vmatprep.subr.mxu0 0.0
    %1092 = vmatpush2.msra.mxu0 0.0
    %1093 = vmatprep.subr.mxu0 0.0
    %1094 = vmatpush2.msra.mxu0 0.0
    %1095 = vmatprep.subr.mxu0 0.0
    %1096 = vmatpush2.msra.mxu0 0.0
    %1097 = vmatprep.mubr.f32.mxu0 0.0
    %1098 = vmatmul.mubr.f32.gmra.mxu0 %v1028
    %v1099 = vpop.f32.mrf.mxu0
    %v1100 = vadd.f32 %v1010, %v1099
    %v1101 = vpop.f32.mrf.mxu0
    %1102 = vmatprep.mubr.f32.mxu0 0.0
    %1103 = vmatmul.mubr.f32.gmra.mxu0 %v1031
    %v1104 = vpop.f32.mrf.mxu0
    %v1105 = vadd.f32 %v1010, %v1104
    %v1106 = vpop.f32.mrf.mxu0
    %1107 = vdwg.mxu0
    %v1108 = vadd.f32 %v18, %v1100
    %v1109 = vadd.f32 %v19, %v1105
    %v1110 = vsel %vm33, %v1108, 0.0
    %1111 = vadd.xlane.f32.xlu0 %v1110
    %v1112 = vpop.xlane.xlu0 %1111
    %v1113 = vsel %vm33, %v1109, 0.0
    %1114 = vadd.xlane.f32.xlu0 %v1113
    %v1115 = vpop.xlane.xlu0 %1114
    %v1116 = vrcp.pop 32.0
    %v1117 = vmul.f32 %v1112, %v1116
    %v1118 = vmul.f32 %v1115, %v1116
    %v1119 = vsub.f32 %v1108, %v1117
    %v1120 = vsub.f32 %v1109, %v1118
    %v1121 = vmul.f32 %v1119, %v1119
    %v1122 = vmul.f32 %v1120, %v1120
    %v1123 = vsel %vm33, %v1121, 0.0
    %1124 = vadd.xlane.f32.xlu0 %v1123
    %v1125 = vpop.xlane.xlu0 %1124
    %v1126 = vsel %vm33, %v1122, 0.0
    %1127 = vadd.xlane.f32.xlu0 %v1126
    %v1128 = vpop.xlane.xlu0 %1127
    %v1129 = vmul.f32 %v1125, %v1116
    %v1130 = vmul.f32 %v1128, %v1116
    %v1131 = vadd.f32 %v1129, 1e-05
    %v1132 = vadd.f32 %v1130, 1e-05
    %v1133 = vrsqrt.pop %v1131
    %v1134 = vrsqrt.pop %v1132
    %v1135 = vmul.f32 %v1119, %v1133
    %v1136 = vmul.f32 %v1120, %v1134
    %v1137 = vlaneseq
    %v1138 = vshrl.u32 %v1137, 7
    %v1139 = vsub.s32 4, %v1138
    %v1140 = vrot.slane %v28, %v1139
    %v1141 = vmul.f32 %v1135, %v1140
    %v1142 = vmul.f32 %v1136, %v1140
    %v1143 = vlaneseq
    %v1144 = vshrl.u32 %v1143, 7
    %v1145 = vsub.s32 5, %v1144
    %v1146 = vrot.slane %v28, %v1145
    %v1147 = vadd.f32 %v1141, %v1146
    %v1148 = vadd.f32 %v1142, %v1146
    %v1149 = vlaneseq
    %v1150 = vshrl.u32 %v1149, 7
    %v1151 = vsub.s32 2, %v1150
    %v1152 = vrot.slane %v28, %v1151
    %v1154 = vsel %vm33, %v1147, 0
    %v1157 = vsel %vm33, %v1148, 0
    %1159 = vmatprep.subr.mxu0 0.0
    %1160 = vmatpush1.msra.mxu0 0.0
    %1161 = vmatprep.subr.mxu0 0.0
    %1162 = vmatpush1.msra.mxu0 0.0
    %1163 = vmatprep.subr.mxu0 0.0
    %1164 = vmatpush1.msra.mxu0 0.0
    %1165 = vmatprep.subr.mxu0 0.0
    %1166 = vmatpush1.msra.mxu0 0.0
    %1167 = vmatprep.subr.mxu0 0.0
    %1168 = vmatpush1.msra.mxu0 0.0
    %1169 = vmatprep.subr.mxu0 0.0
    %1170 = vmatpush1.msra.mxu0 0.0
    %1171 = vmatprep.subr.mxu0 0.0
    %1172 = vmatpush1.msra.mxu0 0.0
    %1173 = vmatprep.subr.mxu0 0.0
    %1174 = vmatpush1.msra.mxu0 0.0
    %1175 = vmatprep.subr.mxu0 0.0
    %1176 = vmatpush1.msra.mxu0 0.0
    %1177 = vmatprep.subr.mxu0 0.0
    %1178 = vmatpush1.msra.mxu0 0.0
    %1179 = vmatprep.subr.mxu0 0.0
    %1180 = vmatpush1.msra.mxu0 0.0
    %1181 = vmatprep.subr.mxu0 0.0
    %1182 = vmatpush1.msra.mxu0 0.0
    %1183 = vmatprep.subr.mxu0 0.0
    %1184 = vmatpush1.msra.mxu0 %v27
    %1185 = vmatprep.subr.mxu0 0.0
    %1186 = vmatpush1.msra.mxu0 %v25
    %1187 = vmatprep.subr.mxu0 0.0
    %1188 = vmatpush1.msra.mxu0 %v23
    %1189 = vmatprep.subr.mxu0 0.0
    %1190 = vmatpush1.msra.mxu0 %v21
    %1191 = vmatprep.subr.mxu0 0.0
    %1192 = vmatpush2.msra.mxu0 0.0
    %1193 = vmatprep.subr.mxu0 0.0
    %1194 = vmatpush2.msra.mxu0 0.0
    %1195 = vmatprep.subr.mxu0 0.0
    %1196 = vmatpush2.msra.mxu0 0.0
    %1197 = vmatprep.subr.mxu0 0.0
    %1198 = vmatpush2.msra.mxu0 0.0
    %1199 = vmatprep.subr.mxu0 0.0
    %1200 = vmatpush2.msra.mxu0 0.0
    %1201 = vmatprep.subr.mxu0 0.0
    %1202 = vmatpush2.msra.mxu0 0.0
    %1203 = vmatprep.subr.mxu0 0.0
    %1204 = vmatpush2.msra.mxu0 0.0
    %1205 = vmatprep.subr.mxu0 0.0
    %1206 = vmatpush2.msra.mxu0 0.0
    %1207 = vmatprep.subr.mxu0 0.0
    %1208 = vmatpush2.msra.mxu0 0.0
    %1209 = vmatprep.subr.mxu0 0.0
    %1210 = vmatpush2.msra.mxu0 0.0
    %1211 = vmatprep.subr.mxu0 0.0
    %1212 = vmatpush2.msra.mxu0 0.0
    %1213 = vmatprep.subr.mxu0 0.0
    %1214 = vmatpush2.msra.mxu0 0.0
    %1215 = vmatprep.subr.mxu0 0.0
    %1216 = vmatpush2.msra.mxu0 0.0
    %1217 = vmatprep.subr.mxu0 0.0
    %1218 = vmatpush2.msra.mxu0 0.0
    %1219 = vmatprep.subr.mxu0 0.0
    %1220 = vmatpush2.msra.mxu0 0.0
    %1221 = vmatprep.subr.mxu0 0.0
    %1222 = vmatpush2.msra.mxu0 0.0
    %1223 = vmatprep.mubr.f32.mxu0 0.0
    %1224 = vmatmul.mubr.f32.gmra.mxu0 %v1154
    %v1225 = vpop.f32.mrf.mxu0
    %v1226 = vadd.f32 %v1152, %v1225
    %v1227 = vpop.f32.mrf.mxu0
    %1228 = vmatprep.mubr.f32.mxu0 0.0
    %1229 = vmatmul.mubr.f32.gmra.mxu0 %v1157
    %v1230 = vpop.f32.mrf.mxu0
    %v1231 = vadd.f32 %v1152, %v1230
    %v1232 = vpop.f32.mrf.mxu0
    %1233 = vdwg.mxu0
    %v1234 = vmax.f32 %v1226, 0.0
    %v1235 = vmax.f32 %v1231, 0.0
    %v1236 = vld [vmem:[%s2] sm:$0xff]
    %v1237 = vld [vmem:[%s2 + $0x8] sm:$0xff]
    %v1238 = vld [vmem:[%s2 + $0x10] sm:$0xff]
    %v1239 = vld [vmem:[%s2 + $0x18] sm:$0xff]
    %v1240 = vld [vmem:[%s2 + $0x20] sm:$0xff]
    %v1241 = vld [vmem:[%s2 + $0x28] sm:$0xff]
    %v1242 = vld [vmem:[%s2 + $0x30] sm:$0xff]
    %v1243 = vld [vmem:[%s2 + $0x38] sm:$0xff]
    %v1244 = vlaneseq
    %v1245 = vshrl.u32 %v1244, 7
    %v1246 = vsub.s32 3, %v1245
    %v1247 = vrot.slane %v28, %v1246
    %vm1248 = vcmask 523264
    %v1250 = vsel %vm1248, %v1234, 0
    %v1253 = vsel %vm1248, %v1235, 0
    %1255 = vmatprep.subr.mxu0 0.0
    %1256 = vmatpush1.msra.mxu0 0.0
    %1257 = vmatprep.subr.mxu0 0.0
    %1258 = vmatpush1.msra.mxu0 0.0
    %1259 = vmatprep.subr.mxu0 0.0
    %1260 = vmatpush1.msra.mxu0 0.0
    %1261 = vmatprep.subr.mxu0 0.0
    %1262 = vmatpush1.msra.mxu0 0.0
    %1263 = vmatprep.subr.mxu0 0.0
    %1264 = vmatpush1.msra.mxu0 0.0
    %1265 = vmatprep.subr.mxu0 0.0
    %1266 = vmatpush1.msra.mxu0 0.0
    %1267 = vmatprep.subr.mxu0 0.0
    %1268 = vmatpush1.msra.mxu0 0.0
    %1269 = vmatprep.subr.mxu0 0.0
    %1270 = vmatpush1.msra.mxu0 0.0
    %1271 = vmatprep.subr.mxu0 0.0
    %1272 = vmatpush1.msra.mxu0 %v1243
    %1273 = vmatprep.subr.mxu0 0.0
    %1274 = vmatpush1.msra.mxu0 %v1242
    %1275 = vmatprep.subr.mxu0 0.0
    %1276 = vmatpush1.msra.mxu0 %v1241
    %1277 = vmatprep.subr.mxu0 0.0
    %1278 = vmatpush1.msra.mxu0 %v1240
    %1279 = vmatprep.subr.mxu0 0.0
    %1280 = vmatpush1.msra.mxu0 %v1239
    %1281 = vmatprep.subr.mxu0 0.0
    %1282 = vmatpush1.msra.mxu0 %v1238
    %1283 = vmatprep.subr.mxu0 0.0
    %1284 = vmatpush1.msra.mxu0 %v1237
    %1285 = vmatprep.subr.mxu0 0.0
    %1286 = vmatpush1.msra.mxu0 %v1236
    %1287 = vmatprep.subr.mxu0 0.0
    %1288 = vmatpush2.msra.mxu0 0.0
    %1289 = vmatprep.subr.mxu0 0.0
    %1290 = vmatpush2.msra.mxu0 0.0
    %1291 = vmatprep.subr.mxu0 0.0
    %1292 = vmatpush2.msra.mxu0 0.0
    %1293 = vmatprep.subr.mxu0 0.0
    %1294 = vmatpush2.msra.mxu0 0.0
    %1295 = vmatprep.subr.mxu0 0.0
    %1296 = vmatpush2.msra.mxu0 0.0
    %1297 = vmatprep.subr.mxu0 0.0
    %1298 = vmatpush2.msra.mxu0 0.0
    %1299 = vmatprep.subr.mxu0 0.0
    %1300 = vmatpush2.msra.mxu0 0.0
    %1301 = vmatprep.subr.mxu0 0.0
    %1302 = vmatpush2.msra.mxu0 0.0
    %1303 = vmatprep.subr.mxu0 0.0
    %1304 = vmatpush2.msra.mxu0 0.0
    %1305 = vmatprep.subr.mxu0 0.0
    %1306 = vmatpush2.msra.mxu0 0.0
    %1307 = vmatprep.subr.mxu0 0.0
    %1308 = vmatpush2.msra.mxu0 0.0
    %1309 = vmatprep.subr.mxu0 0.0
    %1310 = vmatpush2.msra.mxu0 0.0
    %1311 = vmatprep.subr.mxu0 0.0
    %1312 = vmatpush2.msra.mxu0 0.0
    %1313 = vmatprep.subr.mxu0 0.0
    %1314 = vmatpush2.msra.mxu0 0.0
    %1315 = vmatprep.subr.mxu0 0.0
    %1316 = vmatpush2.msra.mxu0 0.0
    %1317 = vmatprep.subr.mxu0 0.0
    %1318 = vmatpush2.msra.mxu0 0.0
    %1319 = vmatprep.mubr.f32.mxu0 0.0
    %1320 = vmatmul.mubr.f32.gmra.mxu0 %v1250
    %v1321 = vpop.f32.mrf.mxu0
    %v1322 = vadd.f32 %v1247, %v1321
    %v1323 = vpop.f32.mrf.mxu0
    %1324 = vmatprep.mubr.f32.mxu0 0.0
    %1325 = vmatmul.mubr.f32.gmra.mxu0 %v1253
    %v1326 = vpop.f32.mrf.mxu0
    %v1327 = vadd.f32 %v1247, %v1326
    %v1328 = vpop.f32.mrf.mxu0
    %1329 = vdwg.mxu0
    %v1330 = vadd.f32 %v1322, %v1322
    %v1331 = vadd.f32 %v1327, %v1327
    %v1332 = vsel %vm33, %v1330, 0.0
    %1333 = vadd.xlane.f32.xlu0 %v1332
    %v1334 = vpop.xlane.xlu0 %1333
    %v1335 = vsel %vm33, %v1331, 0.0
    %1336 = vadd.xlane.f32.xlu0 %v1335
    %v1337 = vpop.xlane.xlu0 %1336
    %v1338 = vmul.f32 %v1334, %v1116
    %v1339 = vmul.f32 %v1337, %v1116
    %v1340 = vsub.f32 %v1330, %v1338
    %v1341 = vsub.f32 %v1331, %v1339
    %v1342 = vmul.f32 %v1340, %v1340
    %v1343 = vmul.f32 %v1341, %v1341
    %v1344 = vsel %vm33, %v1342, 0.0
    %1345 = vadd.xlane.f32.xlu0 %v1344
    %v1346 = vpop.xlane.xlu0 %1345
    %v1347 = vsel %vm33, %v1343, 0.0
    %1348 = vadd.xlane.f32.xlu0 %v1347
    %v1349 = vpop.xlane.xlu0 %1348
    %v1350 = vmul.f32 %v1346, %v1116
    %v1351 = vmul.f32 %v1349, %v1116
    %v1352 = vadd.f32 %v1350, 1e-05
    %v1353 = vadd.f32 %v1351, 1e-05
    %v1354 = vrsqrt.pop %v1352
    %v1355 = vrsqrt.pop %v1353
    %v1356 = vmul.f32 %v1340, %v1354
    %v1357 = vmul.f32 %v1341, %v1355
    %v1358 = vlaneseq
    %v1359 = vshrl.u32 %v1358, 7
    %v1360 = vsub.s32 6, %v1359
    %v1361 = vrot.slane %v28, %v1360
    %v1362 = vmul.f32 %v1356, %v1361
    %v1363 = vmul.f32 %v1357, %v1361
    %v1364 = vlaneseq
    %v1365 = vshrl.u32 %v1364, 7
    %v1366 = vsub.s32 7, %v1365
    %v1367 = vrot.slane %v28, %v1366
    %v1368 = vadd.f32 %v1362, %v1367
    %v1369 = vadd.f32 %v1363, %v1367
    %1370 = vst.msk [vmem:[#allocation2] sm:$0xff] %vm33, %v1368
    %1371 = vst.msk [vmem:[#allocation2 + $0x8] sm:$0xff] %vm33, %v1369
    // Predicated region
    $region18: #{tpu_custom_call.1} parent=1 // pred_check
      _
    $region19: #{tpu_custom_call.1} parent=1 // pred_check_branch
      %1373 = sbr.rel (0) target = $region21
    $region20: #{tpu_custom_call.1} parent=1 // pred_region
      %s1375 = ssub.s32 256, 256
      %1376 = vsyncadd [#allocation3], %s1375
      %s1377 = sshll.u32 [#allocation2], 4
      %s1378 = int_to_ptr.vmem [resolvable:$true] %s1377
      %1383 = dma.vmem_to_hbm [thread:$0]  %s1378, 256, %s4, [#allocation3], 128, 128, 8
    $region21: #{tpu_custom_call.1} parent=1 // pred_fallthru
      _
    // Predicated region
    $region22: #{tpu_custom_call.1} parent=1 // pred_check
      _
    $region23: #{tpu_custom_call.1} parent=1 // pred_check_branch
      %1385 = sbr.rel (0) target = $region25
    $region24: #{tpu_custom_call.1} parent=1 // pred_region
      %1386 = dma.done [#allocation3], 256
    $region25: #{tpu_custom_call.1} parent=1 // pred_fallthru
      _
    %1387 = vsyncpa [#allocation3], 1

</llo_original>
